<compile_context>
chip_gen: v6e
topology: v6e:2x2x1
jax: 0.10.0
libtpu: 0.0.40
codegen_flags: <defaults>
</compile_context>

<pallas_src>
import jax
import jax.numpy as jnp
from jax.experimental import pallas as pl
from jax.experimental.pallas import tpu as pltpu

EPS = 1e-5
LANE = 128
SUBLANE = 8


def _round_up(a, b):
    return (a + b - 1) // b * b


def _vmem_limit_bytes():
    """Per-generation scoped-VMEM cap: ~half of physical, in [32, 64] MiB."""
    cap = 64 * 1024 * 1024
    try:
        cap = int(pltpu.get_tpu_info().vmem_capacity_bytes)
    except Exception:
        pass  # fall back to a conservative default
    return int(max(32 * 1024 * 1024, min(int(cap * 0.5), 64 * 1024 * 1024)))


# ---------------------------------------------------------------------------
# Kernel 1: per-feature sum / sum-of-squares, accumulated over row tiles.
# Grid = (core_split [parallel], tiles_per_split [arbitrary]).  Each split
# owns its own (8, Dp) partial block (row 0 = sum, row 1 = sumsq, rows 2..7
# keep the block sublane-aligned); the wrapper sums the partials.
# ---------------------------------------------------------------------------
def bn_stats_kernel(x_ref, o_ref):
    @pl.when(pl.program_id(1) == 0)
    def _():
        o_ref[...] = jnp.zeros_like(o_ref)

    x = x_ref[...].astype(jnp.float32)                    # (Rt, Dp)
    s1 = jnp.sum(x, axis=0, keepdims=True)                # (1, Dp)
    s2 = jnp.sum(x * x, axis=0, keepdims=True)            # (1, Dp)
    pad = jnp.zeros((6, x.shape[1]), jnp.float32)
    o_ref[...] += jnp.concatenate([s1, s2, pad], axis=0)  # (8, Dp), unmasked


# ---------------------------------------------------------------------------
# Kernel 2: row-tiled projection  x @ W_fold + bias  (BN folded into W_fold).
# x is already stored in compute_dtype, so no separate cast pass is needed.
# ---------------------------------------------------------------------------
def bn_proj_kernel(x_ref, w_ref, b_ref, o_ref):
    proj = jnp.dot(x_ref[...], w_ref[...],
                   preferred_element_type=jnp.float32)    # (Rt, 4Hp) f32 acc
    o_ref[...] = (proj + b_ref[...]).astype(o_ref.dtype)


# ---------------------------------------------------------------------------
# Kernel 3: LSTM recurrence.  Grid = (batch_block [parallel], chunk
# [arbitrary]); Tc timesteps per chunk; h/c carried in f32 scratch.
# Gate layout is (i, f, o, g): one tanh-based sigmoid over a contiguous
# (Nb, 3Hp) slab + one tanh over (Nb, Hp) -> exactly 1 EUP op per gate elem.
# ---------------------------------------------------------------------------
def lstm_chunk_kernel(xp_ref, whh_ref, o_ref, h_scr, c_scr):
    @pl.when(pl.program_id(1) == 0)          # new batch block -> reset state
    def _():
        h_scr[...] = jnp.zeros_like(h_scr)
        c_scr[...] = jnp.zeros_like(c_scr)

    tc = xp_ref.shape[0]
    hp = whh_ref.shape[0]
    whh = whh_ref[...]                       # hoisted once per chunk

    def step(t, carry):
        h, c = carry
        # NOTE: in bf16 mode the recurrent-matmul LHS is rounded to bf16 each
        # step (state itself stays f32); acceptable here, validated loosely.
        gates = xp_ref[t].astype(jnp.float32) + jnp.dot(
            h.astype(whh.dtype), whh, preferred_element_type=jnp.float32)
        sig = 0.5 * (jnp.tanh(0.5 * gates[:, :3 * hp]) + 1.0)   # i, f, o slab
        i_g = sig[:, 0 * hp:1 * hp]
        f_g = sig[:, 1 * hp:2 * hp]
        o_g = sig[:, 2 * hp:3 * hp]
        g_g = jnp.tanh(gates[:, 3 * hp:])
        c_new = f_g * c + i_g * g_g
        h_new = o_g * jnp.tanh(c_new)
        o_ref[t] = h_new.astype(o_ref.dtype)
        return h_new, c_new

    # Bounded unroll (not full): keeps code size / vreg pressure in check at
    # realistic Hp while still amortizing loop overhead.
    h_fin, c_fin = jax.lax.fori_loop(0, tc, step, (h_scr[...], c_scr[...]),
                                     unroll=min(tc, 8))
    h_scr[...] = h_fin
    c_scr[...] = c_fin


# ---------------------------------------------------------------------------
# Wrapper.
# ---------------------------------------------------------------------------
def batch_rnn_forward(x, gamma, beta, w_ih, w_hh, *,
                      compute_dtype=jnp.float32, row_tile=512, time_chunk=32):
    """x: (T, N, D); gamma/beta: (D,); w_ih: (4H, D); w_hh: (4H, H).

    Returns (T, N, H) in x.dtype (BatchRNN forward, training-mode BN).
    """
    T, N, D = x.shape
    H = w_hh.shape[1]
    assert w_ih.shape == (4 * H, D) and w_hh.shape == (4 * H, H)

    f32 = jnp.float32
    itemsize = jnp.dtype(compute_dtype).itemsize
    vmem_limit = _vmem_limit_bytes()

    # ---- padding / tiling geometry ---------------------------------------
    n_bb = 2 if N > SUBLANE else 1                  # batch blocks (v7x cores)
    Np = _round_up(max(N, SUBLANE), SUBLANE * n_bb)
    Nb = Np // n_bb
    Dp = _round_up(D, LANE)                         # lane-dense features
    Hp = _round_up(H, LANE)                         # lane-aligned gate blocks
    H4 = 4 * Hp
    Tc = min(time_chunk, T)                         # LSTM steps per grid step
    Tp = _round_up(T, Tc)
    n_chunks = Tp // Tc

    # Group whole LSTM chunks into one stats/proj row tile so the tile count
    # divides T*N exactly (no rows_pad, no trailing slice of the projection).
    k = 1
    while (k * 2 <= n_chunks and n_chunks % (k * 2) == 0
           and Tc * Np * k < row_tile):
        k *= 2
    Tr = k * Tc
    Rt = Tr * Np                                    # rows per stats/proj tile
    n_t_tiles = Tp // Tr
    rows = Tp * Np

    # Split the stats pass across two cores when the tile count allows it.
    n_split = 2 if (n_t_tiles >= 2 and n_t_tiles % 2 == 0) else 1
    tiles_per_split = n_t_tiles // n_split

    # ---- single padded copy of x, shared by kernels 1 and 2 ---------------
    x_pad = jnp.pad(x.astype(compute_dtype),
                    ((0, Tp - T), (0, Np - N), (0, Dp - D)))
    x_flat = x_pad.reshape(rows, Dp)                # contiguous -> bitcast

    # ---- Kernel 1: BN batch statistics (sum, sumsq) ------------------------
    stats_raw = pl.pallas_call(
        bn_stats_kernel,
        out_shape=jax.ShapeDtypeStruct((8 * n_split, Dp), f32),
        grid_spec=pltpu.PrefetchScalarGridSpec(
            num_scalar_prefetch=0,
            grid=(n_split, tiles_per_split),
            in_specs=[pl.BlockSpec(
                (Rt, Dp), lambda s, i: (s * tiles_per_split + i, 0))],
            out_specs=pl.BlockSpec((8, Dp), lambda s, i: (s, 0)),
        ),
        compiler_params=pltpu.CompilerParams(
            dimension_semantics=("parallel", "arbitrary"),
            vmem_limit_bytes=vmem_limit),
        cost_estimate=pl.CostEstimate(
            flops=3 * rows * Dp, transcendentals=0,
            bytes_accessed=rows * Dp * itemsize + 8 * n_split * Dp * 4),
    )(x_flat)

    parts = stats_raw.reshape(n_split, 8, Dp)
    sums = parts[:, 0, :].sum(axis=0)               # (Dp,)
    sumsq = parts[:, 1, :].sum(axis=0)              # (Dp,)

    # ---- fold train-mode BN (biased variance) into W_ih --------------------
    count = f32(T * N)                              # true (unpadded) count
    mean = sums / count
    var = jnp.maximum(sumsq / count - mean * mean, 0.0)   # guard cancellation
    gamma_p = jnp.pad(gamma.astype(f32), (0, Dp - D))
    beta_p = jnp.pad(beta.astype(f32), (0, Dp - D))
    scale = gamma_p * jax.lax.rsqrt(var + EPS)      # (Dp,), 0 on padded cols
    shift = beta_p - mean * scale                   # (Dp,), 0 on padded cols

    # PyTorch gate order (i, f, g, o) -> kernel order (i, f, o, g); pad H->Hp.
    perm = jnp.array([0, 1, 3, 2])
    wih_r = w_ih.astype(f32).reshape(4, H, D)[perm]
    whh_r = w_hh.astype(f32).reshape(4, H, H)[perm]
    wih_t = jnp.pad(wih_r, ((0, 0), (0, Hp - H), (0, Dp - D))).reshape(H4, Dp).T
    whh_t = jnp.pad(whh_r, ((0, 0), (0, Hp - H), (0, Hp - H))).reshape(H4, Hp).T

    w_fold = (wih_t * scale[:, None]).astype(compute_dtype)   # (Dp, 4Hp)
    bias = (shift @ wih_t).reshape(1, H4)                     # f32, 0 on pads
    whh_c = whh_t.astype(compute_dtype)                       # (Hp, 4Hp)

    # ---- Kernel 2: row-tiled folded-BN projection --------------------------
    xproj = pl.pallas_call(
        bn_proj_kernel,
        out_shape=jax.ShapeDtypeStruct((rows, H4), compute_dtype),
        grid_spec=pltpu.PrefetchScalarGridSpec(
            num_scalar_prefetch=0,
            grid=(n_t_tiles,),
            in_specs=[pl.BlockSpec((Rt, Dp), lambda i: (i, 0)),
                      pl.BlockSpec((Dp, H4), lambda i: (0, 0)),
                      pl.BlockSpec((1, H4), lambda i: (0, 0))],
            out_specs=pl.BlockSpec((Rt, H4), lambda i: (i, 0)),
        ),
        compiler_params=pltpu.CompilerParams(
            dimension_semantics=("parallel",),
            vmem_limit_bytes=vmem_limit),
        cost_estimate=pl.CostEstimate(
            flops=2 * rows * Dp * H4, transcendentals=0,
            bytes_accessed=(rows * Dp + Dp * H4 + rows * H4) * itemsize
                           + H4 * 4),
    )(x_flat, w_fold, bias)

    xproj3 = xproj.reshape(Tp, Np, H4)              # contiguous -> bitcast

    # ---- Kernel 3: chunked LSTM recurrence (batch-parallel x time) ---------
    out = pl.pallas_call(
        lstm_chunk_kernel,
        out_shape=jax.ShapeDtypeStruct((Tp, Np, Hp), compute_dtype),
        grid_spec=pltpu.PrefetchScalarGridSpec(
            num_scalar_prefetch=0,
            grid=(n_bb, n_chunks),
            in_specs=[pl.BlockSpec((Tc, Nb, H4), lambda b, c: (c, b, 0)),
                      pl.BlockSpec((Hp, H4), lambda b, c: (0, 0))],
            out_specs=pl.BlockSpec((Tc, Nb, Hp), lambda b, c: (c, b, 0)),
            scratch_shapes=[pltpu.VMEM((Nb, Hp), f32),
                            pltpu.VMEM((Nb, Hp), f32)],
        ),
        compiler_params=pltpu.CompilerParams(
            dimension_semantics=("parallel", "arbitrary"),
            vmem_limit_bytes=vmem_limit),
        cost_estimate=pl.CostEstimate(
            flops=2 * Tp * Np * Hp * H4 + 12 * Tp * Np * Hp,
            transcendentals=5 * Tp * Np * Hp,
            bytes_accessed=(Tp * Np * H4 + Hp * H4 + Tp * Np * Hp) * itemsize),
    )(xproj3, whh_c)

    return out[:T, :N, :H].astype(x.dtype)


# ---------------------------------------------------------------------------
# Pure-JAX reference (PyTorch semantics, for correctness check).
# ---------------------------------------------------------------------------
def reference_forward(x, gamma, beta, w_ih, w_hh):
    T, N, D = x.shape
    H = w_hh.shape[1]
    xf = x.reshape(T * N, D)
    mean = xf.mean(0)
    var = ((xf - mean) ** 2).mean(0)
    xn = ((xf - mean) / jnp.sqrt(var + EPS) * gamma + beta).reshape(T, N, D)

    def step(carry, xt):
        h, c = carry
        gates = xt @ w_ih.T + h @ w_hh.T
        i, f, g, o = jnp.split(gates, 4, axis=-1)
        i = jax.nn.sigmoid(i)
        f = jax.nn.sigmoid(f)
        g = jnp.tanh(g)
        o = jax.nn.sigmoid(o)
        c = f * c + i * g
        h = o * jnp.tanh(c)
        return (h, c), h

    h0 = jnp.zeros((N, H), jnp.float32)
    c0 = jnp.zeros((N, H), jnp.float32)
    _, ys = jax.lax.scan(step, (h0, c0), xn)
    return ys


if __name__ == "__main__":
    T, N, D, H = 8, 4, 32, 32    # seq, batch, input_size, hidden_size

    key = jax.random.PRNGKey(0)
    kx, kg, kb, kih, khh = jax.random.split(key, 5)

    x = jax.random.normal(kx, (T, N, D), dtype=jnp.float32)
    gamma = 1.0 + 0.1 * jax.random.normal(kg, (D,), dtype=jnp.float32)
    beta = 0.1 * jax.random.normal(kb, (D,), dtype=jnp.float32)

    # LSTM params, PyTorch-style uniform(-1/sqrt(H), 1/sqrt(H)), bias=False.
    ws = 1.0 / jnp.sqrt(jnp.float32(H))
    w_ih = jax.random.uniform(kih, (4 * H, D), jnp.float32, -ws, ws)
    w_hh = jax.random.uniform(khh, (4 * H, H), jnp.float32, -ws, ws)

    fwd = jax.jit(batch_rnn_forward,
                  static_argnames=("compute_dtype", "row_tile", "time_chunk"))

    ref = reference_forward(x, gamma, beta, w_ih, w_hh)

    # f32 path — tight tolerance (primary correctness gate).
    out_f32 = jax.block_until_ready(
        fwd(x, gamma, beta, w_ih, w_hh, compute_dtype=jnp.float32))
    assert out_f32.shape == (T, N, H)
    err = float(jnp.max(jnp.abs(out_f32 - ref)))
    assert err < 1e-4, f"f32 mismatch vs JAX reference: {err}"

    # bf16 fast path: bf16 stats / matmul operands / output, f32 state —
    # reduced-precision mode, sanity-checked against the f32 reference.
    out_bf16 = jax.block_until_ready(
        fwd(x, gamma, beta, w_ih, w_hh, compute_dtype=jnp.bfloat16))
    err_bf16 = float(jnp.max(jnp.abs(out_bf16.astype(jnp.float32) - ref)))
    assert err_bf16 < 1e-1, f"bf16 mismatch vs JAX reference: {err_bf16}"

    print("KERNEL_OK")
</pallas_src>

<mosaic_0001>
module attributes {stable_mosaic.version = 11 : i64} {
  func.func @bn_stats_kernel(%arg0: i32, %arg1: i32, %arg2: memref<64x128xf32, #tpu.memory_space<vmem>>, %arg3: memref<8x128xf32, #tpu.memory_space<vmem>>) attributes {dimension_semantics = [#tpu.dimension_semantics<parallel>, #tpu.dimension_semantics<arbitrary>], iteration_bounds = array<i64: 1, 1>, scalar_prefetch = 0 : i64, scratch_operands = 0 : i64, tpu.core_type = #tpu.core_type<tc>, window_params = [{transform_indices = @transform_0, window_bounds = array<i64: 64, 128>}, {transform_indices = @transform_1, window_bounds = array<i64: 8, 128>}]} {
    %c0_i32 = arith.constant 0 : i32
    %0 = arith.cmpi eq, %arg1, %c0_i32 : i32
    %1 = arith.extui %0 : i1 to i32
    %c0_i32_0 = arith.constant 0 : i32
    %2 = arith.cmpi ne, %1, %c0_i32_0 : i32
    scf.if %2 {
      %cst_8 = arith.constant 0.000000e+00 : f32
      %14 = vector.broadcast %cst_8 : f32 to vector<8x128xf32>
      %c0_9 = arith.constant 0 : index
      %c0_10 = arith.constant 0 : index
      %15 = vector.load %arg3[%c0_9, %c0_10] : memref<8x128xf32, #tpu.memory_space<vmem>>, vector<8x128xf32>
      tpu.vector_store %arg3[%c0_9, %c0_10], %14 {strides = array<i32>} : memref<8x128xf32, #tpu.memory_space<vmem>>, vector<8x128xf32>,
    } else {
    }
    %c0 = arith.constant 0 : index
    %c0_1 = arith.constant 0 : index
    %3 = vector.load %arg2[%c0, %c0_1] : memref<64x128xf32, #tpu.memory_space<vmem>>, vector<64x128xf32>
    %cst = arith.constant dense<0.000000e+00> : vector<128xf32>
    %4 = vector.multi_reduction <add>, %3, %cst [0] : vector<64x128xf32> to vector<128xf32>
    %5 = vector.shape_cast %4 : vector<128xf32> to vector<1x128xf32>
    %6 = arith.mulf %3, %3 : vector<64x128xf32>
    %cst_2 = arith.constant dense<0.000000e+00> : vector<128xf32>
    %7 = vector.multi_reduction <add>, %6, %cst_2 [0] : vector<64x128xf32> to vector<128xf32>
    %8 = vector.shape_cast %7 : vector<128xf32> to vector<1x128xf32>
    %cst_3 = arith.constant 0.000000e+00 : f32
    %9 = vector.broadcast %cst_3 : f32 to vector<6x128xf32>
    %c0_4 = arith.constant 0 : index
    %c0_5 = arith.constant 0 : index
    %10 = vector.load %arg3[%c0_4, %c0_5] : memref<8x128xf32, #tpu.memory_space<vmem>>, vector<8x128xf32>
    %11 = tpu.concatenate %5, %8, %9 in 0 : vector<1x128xf32>, vector<1x128xf32>, vector<6x128xf32> -> vector<8x128xf32>
    %12 = arith.addf %10, %11 : vector<8x128xf32>
    %c0_6 = arith.constant 0 : index
    %c0_7 = arith.constant 0 : index
    %13 = vector.load %arg3[%c0_6, %c0_7] : memref<8x128xf32, #tpu.memory_space<vmem>>, vector<8x128xf32>
    tpu.vector_store %arg3[%c0_6, %c0_7], %12 {strides = array<i32>} : memref<8x128xf32, #tpu.memory_space<vmem>>, vector<8x128xf32>,
    return
  }
  func.func @transform_0(%arg0: i32, %arg1: i32) -> (i32, i32) {
    %c1_i32 = arith.constant 1 : i32
    %0 = arith.muli %arg0, %c1_i32 : i32
    %1 = arith.addi %0, %arg1 : i32
    %c0_i32 = arith.constant 0 : i32
    %c0_i32_0 = arith.constant 0 : i32
    return %1, %c0_i32 : i32, i32
  }
  func.func @transform_1(%arg0: i32, %arg1: i32) -> (i32, i32) {
    %c0_i32 = arith.constant 0 : i32
    %c0_i32_0 = arith.constant 0 : i32
    return %arg0, %c0_i32 : i32, i32
  }
}

module attributes {stable_mosaic.version = 11 : i64} {
  func.func @lstm_chunk_kernel(%arg0: i32, %arg1: i32, %arg2: memref<8x8x512xf32, #tpu.memory_space<vmem>>, %arg3: memref<128x512xf32, #tpu.memory_space<vmem>>, %arg4: memref<8x8x128xf32, #tpu.memory_space<vmem>>, %arg5: memref<8x128xf32, #tpu.memory_space<vmem>>, %arg6: memref<8x128xf32, #tpu.memory_space<vmem>>) attributes {dimension_semantics = [#tpu.dimension_semantics<parallel>, #tpu.dimension_semantics<arbitrary>], iteration_bounds = array<i64: 1, 1>, scalar_prefetch = 0 : i64, scratch_operands = 2 : i64, tpu.core_type = #tpu.core_type<tc>, window_params = [{transform_indices = @transform_0, window_bounds = array<i64: 8, 8, 512>}, {pipeline_mode = #tpu.pipeline_mode<synchronous>, transform_indices = @transform_1, window_bounds = array<i64: 128, 512>}, {transform_indices = @transform_2, window_bounds = array<i64: 8, 8, 128>}]} {
    %c0_i32 = arith.constant 0 : i32
    %0 = arith.cmpi eq, %arg1, %c0_i32 : i32
    %1 = arith.extui %0 : i1 to i32
    %c0_i32_0 = arith.constant 0 : i32
    %2 = arith.cmpi ne, %1, %c0_i32_0 : i32
    scf.if %2 {
      %cst_74 = arith.constant 0.000000e+00 : f32
      %224 = vector.broadcast %cst_74 : f32 to vector<8x128xf32>
      %c0_75 = arith.constant 0 : index
      %c0_76 = arith.constant 0 : index
      %225 = vector.load %arg5[%c0_75, %c0_76] : memref<8x128xf32, #tpu.memory_space<vmem>>, vector<8x128xf32>
      tpu.vector_store %arg5[%c0_75, %c0_76], %224 {strides = array<i32>} : memref<8x128xf32, #tpu.memory_space<vmem>>, vector<8x128xf32>,
      %cst_77 = arith.constant 0.000000e+00 : f32
      %226 = vector.broadcast %cst_77 : f32 to vector<8x128xf32>
      %c0_78 = arith.constant 0 : index
      %c0_79 = arith.constant 0 : index
      %227 = vector.load %arg6[%c0_78, %c0_79] : memref<8x128xf32, #tpu.memory_space<vmem>>, vector<8x128xf32>
      tpu.vector_store %arg6[%c0_78, %c0_79], %226 {strides = array<i32>} : memref<8x128xf32, #tpu.memory_space<vmem>>, vector<8x128xf32>,
    } else {
    }
    %c0 = arith.constant 0 : index
    %c0_1 = arith.constant 0 : index
    %3 = vector.load %arg3[%c0, %c0_1] : memref<128x512xf32, #tpu.memory_space<vmem>>, vector<128x512xf32>
    %c0_2 = arith.constant 0 : index
    %c0_3 = arith.constant 0 : index
    %4 = vector.load %arg5[%c0_2, %c0_3] : memref<8x128xf32, #tpu.memory_space<vmem>>, vector<8x128xf32>
    %c0_4 = arith.constant 0 : index
    %c0_5 = arith.constant 0 : index
    %5 = vector.load %arg6[%c0_4, %c0_5] : memref<8x128xf32, #tpu.memory_space<vmem>>, vector<8x128xf32>
    %c0_i32_6 = arith.constant 0 : i32
    %6 = arith.index_cast %c0_i32_6 : i32 to index
    %c0_7 = arith.constant 0 : index
    %c0_8 = arith.constant 0 : index
    %7 = vector.load %arg2[%6, %c0_7, %c0_8] : memref<8x8x512xf32, #tpu.memory_space<vmem>>, vector<1x8x512xf32>
    %8 = vector.shape_cast %7 : vector<1x8x512xf32> to vector<8x512xf32>
    %cst = arith.constant dense<0.000000e+00> : vector<8x512xf32>
    %9 = tpu.matmul %4, %3, %cst {dimension_numbers = #tpu.dot_dimension_numbers<[1], [0], [0], [1], [0, 0, 1, 1], [], []>} : vector<8x128xf32>, vector<128x512xf32>, vector<8x512xf32> -> vector<8x512xf32>
    %10 = arith.addf %8, %9 : vector<8x512xf32>
    %11 = vector.extract_strided_slice %10 {offsets = [0, 0], sizes = [8, 384], strides = [1, 1]} : vector<8x512xf32> to vector<8x384xf32>
    %cst_9 = arith.constant 5.000000e-01 : f32
    %12 = vector.broadcast %cst_9 : f32 to vector<8x384xf32>
    %13 = arith.mulf %12, %11 : vector<8x384xf32>
    %14 = math.tanh %13 : vector<8x384xf32>
    %cst_10 = arith.constant 1.000000e+00 : f32
    %15 = vector.broadcast %cst_10 : f32 to vector<8x384xf32>
    %16 = arith.addf %14, %15 : vector<8x384xf32>
    %cst_11 = arith.constant 5.000000e-01 : f32
    %17 = vector.broadcast %cst_11 : f32 to vector<8x384xf32>
    %18 = arith.mulf %17, %16 : vector<8x384xf32>
    %19 = vector.extract_strided_slice %18 {offsets = [0, 0], sizes = [8, 128], strides = [1, 1]} : vector<8x384xf32> to vector<8x128xf32>
    %20 = vector.extract_strided_slice %18 {offsets = [0, 128], sizes = [8, 128], strides = [1, 1]} : vector<8x384xf32> to vector<8x128xf32>
    %21 = vector.extract_strided_slice %18 {offsets = [0, 256], sizes = [8, 128], strides = [1, 1]} : vector<8x384xf32> to vector<8x128xf32>
    %22 = vector.extract_strided_slice %10 {offsets = [0, 384], sizes = [8, 128], strides = [1, 1]} : vector<8x512xf32> to vector<8x128xf32>
    %23 = math.tanh %22 : vector<8x128xf32>
    %24 = arith.mulf %20, %5 : vector<8x128xf32>
    %25 = arith.mulf %19, %23 : vector<8x128xf32>
    %26 = arith.addf %24, %25 : vector<8x128xf32>
    %27 = math.tanh %26 : vector<8x128xf32>
    %28 = arith.mulf %21, %27 : vector<8x128xf32>
    %29 = arith.index_cast %c0_i32_6 : i32 to index
    %c0_12 = arith.constant 0 : index
    %c0_13 = arith.constant 0 : index
    %30 = vector.load %arg4[%29, %c0_12, %c0_13] : memref<8x8x128xf32, #tpu.memory_space<vmem>>, vector<1x8x128xf32>
    %31 = vector.shape_cast %30 : vector<1x8x128xf32> to vector<8x128xf32>
    %32 = vector.shape_cast %28 : vector<8x128xf32> to vector<1x8x128xf32>
    tpu.vector_store %arg4[%29, %c0_12, %c0_13], %32 {strides = array<i32>} : memref<8x8x128xf32, #tpu.memory_space<vmem>>, vector<1x8x128xf32>,
    %c1_i32 = arith.constant 1 : i32
    %33 = arith.index_cast %c1_i32 : i32 to index
    %c0_14 = arith.constant 0 : index
    %c0_15 = arith.constant 0 : index
    %34 = vector.load %arg2[%33, %c0_14, %c0_15] : memref<8x8x512xf32, #tpu.memory_space<vmem>>, vector<1x8x512xf32>
    %35 = vector.shape_cast %34 : vector<1x8x512xf32> to vector<8x512xf32>
    %cst_16 = arith.constant dense<0.000000e+00> : vector<8x512xf32>
    %36 = tpu.matmul %28, %3, %cst_16 {dimension_numbers = #tpu.dot_dimension_numbers<[1], [0], [0], [1], [0, 0, 1, 1], [], []>} : vector<8x128xf32>, vector<128x512xf32>, vector<8x512xf32> -> vector<8x512xf32>
    %37 = arith.addf %35, %36 : vector<8x512xf32>
    %38 = vector.extract_strided_slice %37 {offsets = [0, 0], sizes = [8, 384], strides = [1, 1]} : vector<8x512xf32> to vector<8x384xf32>
    %cst_17 = arith.constant 5.000000e-01 : f32
    %39 = vector.broadcast %cst_17 : f32 to vector<8x384xf32>
    %40 = arith.mulf %39, %38 : vector<8x384xf32>
    %41 = math.tanh %40 : vector<8x384xf32>
    %cst_18 = arith.constant 1.000000e+00 : f32
    %42 = vector.broadcast %cst_18 : f32 to vector<8x384xf32>
    %43 = arith.addf %41, %42 : vector<8x384xf32>
    %cst_19 = arith.constant 5.000000e-01 : f32
    %44 = vector.broadcast %cst_19 : f32 to vector<8x384xf32>
    %45 = arith.mulf %44, %43 : vector<8x384xf32>
    %46 = vector.extract_strided_slice %45 {offsets = [0, 0], sizes = [8, 128], strides = [1, 1]} : vector<8x384xf32> to vector<8x128xf32>
    %47 = vector.extract_strided_slice %45 {offsets = [0, 128], sizes = [8, 128], strides = [1, 1]} : vector<8x384xf32> to vector<8x128xf32>
    %48 = vector.extract_strided_slice %45 {offsets = [0, 256], sizes = [8, 128], strides = [1, 1]} : vector<8x384xf32> to vector<8x128xf32>
    %49 = vector.extract_strided_slice %37 {offsets = [0, 384], sizes = [8, 128], strides = [1, 1]} : vector<8x512xf32> to vector<8x128xf32>
    %50 = math.tanh %49 : vector<8x128xf32>
    %51 = arith.mulf %47, %26 : vector<8x128xf32>
    %52 = arith.mulf %46, %50 : vector<8x128xf32>
    %53 = arith.addf %51, %52 : vector<8x128xf32>
    %54 = math.tanh %53 : vector<8x128xf32>
    %55 = arith.mulf %48, %54 : vector<8x128xf32>
    %56 = arith.index_cast %c1_i32 : i32 to index
    %c0_20 = arith.constant 0 : index
    %c0_21 = arith.constant 0 : index
    %57 = vector.load %arg4[%56, %c0_20, %c0_21] : memref<8x8x128xf32, #tpu.memory_space<vmem>>, vector<1x8x128xf32>
    %58 = vector.shape_cast %57 : vector<1x8x128xf32> to vector<8x128xf32>
    %59 = vector.shape_cast %55 : vector<8x128xf32> to vector<1x8x128xf32>
    tpu.vector_store %arg4[%56, %c0_20, %c0_21], %59 {strides = array<i32>} : memref<8x8x128xf32, #tpu.memory_space<vmem>>, vector<1x8x128xf32>,
    %c2_i32 = arith.constant 2 : i32
    %60 = arith.index_cast %c2_i32 : i32 to index
    %c0_22 = arith.constant 0 : index
    %c0_23 = arith.constant 0 : index
    %61 = vector.load %arg2[%60, %c0_22, %c0_23] : memref<8x8x512xf32, #tpu.memory_space<vmem>>, vector<1x8x512xf32>
    %62 = vector.shape_cast %61 : vector<1x8x512xf32> to vector<8x512xf32>
    %cst_24 = arith.constant dense<0.000000e+00> : vector<8x512xf32>
    %63 = tpu.matmul %55, %3, %cst_24 {dimension_numbers = #tpu.dot_dimension_numbers<[1], [0], [0], [1], [0, 0, 1, 1], [], []>} : vector<8x128xf32>, vector<128x512xf32>, vector<8x512xf32> -> vector<8x512xf32>
    %64 = arith.addf %62, %63 : vector<8x512xf32>
    %65 = vector.extract_strided_slice %64 {offsets = [0, 0], sizes = [8, 384], strides = [1, 1]} : vector<8x512xf32> to vector<8x384xf32>
    %cst_25 = arith.constant 5.000000e-01 : f32
    %66 = vector.broadcast %cst_25 : f32 to vector<8x384xf32>
    %67 = arith.mulf %66, %65 : vector<8x384xf32>
    %68 = math.tanh %67 : vector<8x384xf32>
    %cst_26 = arith.constant 1.000000e+00 : f32
    %69 = vector.broadcast %cst_26 : f32 to vector<8x384xf32>
    %70 = arith.addf %68, %69 : vector<8x384xf32>
    %cst_27 = arith.constant 5.000000e-01 : f32
    %71 = vector.broadcast %cst_27 : f32 to vector<8x384xf32>
    %72 = arith.mulf %71, %70 : vector<8x384xf32>
    %73 = vector.extract_strided_slice %72 {offsets = [0, 0], sizes = [8, 128], strides = [1, 1]} : vector<8x384xf32> to vector<8x128xf32>
    %74 = vector.extract_strided_slice %72 {offsets = [0, 128], sizes = [8, 128], strides = [1, 1]} : vector<8x384xf32> to vector<8x128xf32>
    %75 = vector.extract_strided_slice %72 {offsets = [0, 256], sizes = [8, 128], strides = [1, 1]} : vector<8x384xf32> to vector<8x128xf32>
    %76 = vector.extract_strided_slice %64 {offsets = [0, 384], sizes = [8, 128], strides = [1, 1]} : vector<8x512xf32> to vector<8x128xf32>
    %77 = math.tanh %76 : vector<8x128xf32>
    %78 = arith.mulf %74, %53 : vector<8x128xf32>
    %79 = arith.mulf %73, %77 : vector<8x128xf32>
    %80 = arith.addf %78, %79 : vector<8x128xf32>
    %81 = math.tanh %80 : vector<8x128xf32>
    %82 = arith.mulf %75, %81 : vector<8x128xf32>
    %83 = arith.index_cast %c2_i32 : i32 to index
    %c0_28 = arith.constant 0 : index
    %c0_29 = arith.constant 0 : index
    %84 = vector.load %arg4[%83, %c0_28, %c0_29] : memref<8x8x128xf32, #tpu.memory_space<vmem>>, vector<1x8x128xf32>
    %85 = vector.shape_cast %84 : vector<1x8x128xf32> to vector<8x128xf32>
    %86 = vector.shape_cast %82 : vector<8x128xf32> to vector<1x8x128xf32>
    tpu.vector_store %arg4[%83, %c0_28, %c0_29], %86 {strides = array<i32>} : memref<8x8x128xf32, #tpu.memory_space<vmem>>, vector<1x8x128xf32>,
    %c3_i32 = arith.constant 3 : i32
    %87 = arith.index_cast %c3_i32 : i32 to index
    %c0_30 = arith.constant 0 : index
    %c0_31 = arith.constant 0 : index
    %88 = vector.load %arg2[%87, %c0_30, %c0_31] : memref<8x8x512xf32, #tpu.memory_space<vmem>>, vector<1x8x512xf32>
    %89 = vector.shape_cast %88 : vector<1x8x512xf32> to vector<8x512xf32>
    %cst_32 = arith.constant dense<0.000000e+00> : vector<8x512xf32>
    %90 = tpu.matmul %82, %3, %cst_32 {dimension_numbers = #tpu.dot_dimension_numbers<[1], [0], [0], [1], [0, 0, 1, 1], [], []>} : vector<8x128xf32>, vector<128x512xf32>, vector<8x512xf32> -> vector<8x512xf32>
    %91 = arith.addf %89, %90 : vector<8x512xf32>
    %92 = vector.extract_strided_slice %91 {offsets = [0, 0], sizes = [8, 384], strides = [1, 1]} : vector<8x512xf32> to vector<8x384xf32>
    %cst_33 = arith.constant 5.000000e-01 : f32
    %93 = vector.broadcast %cst_33 : f32 to vector<8x384xf32>
    %94 = arith.mulf %93, %92 : vector<8x384xf32>
    %95 = math.tanh %94 : vector<8x384xf32>
    %cst_34 = arith.constant 1.000000e+00 : f32
    %96 = vector.broadcast %cst_34 : f32 to vector<8x384xf32>
    %97 = arith.addf %95, %96 : vector<8x384xf32>
    %cst_35 = arith.constant 5.000000e-01 : f32
    %98 = vector.broadcast %cst_35 : f32 to vector<8x384xf32>
    %99 = arith.mulf %98, %97 : vector<8x384xf32>
    %100 = vector.extract_strided_slice %99 {offsets = [0, 0], sizes = [8, 128], strides = [1, 1]} : vector<8x384xf32> to vector<8x128xf32>
    %101 = vector.extract_strided_slice %99 {offsets = [0, 128], sizes = [8, 128], strides = [1, 1]} : vector<8x384xf32> to vector<8x128xf32>
    %102 = vector.extract_strided_slice %99 {offsets = [0, 256], sizes = [8, 128], strides = [1, 1]} : vector<8x384xf32> to vector<8x128xf32>
    %103 = vector.extract_strided_slice %91 {offsets = [0, 384], sizes = [8, 128], strides = [1, 1]} : vector<8x512xf32> to vector<8x128xf32>
    %104 = math.tanh %103 : vector<8x128xf32>
    %105 = arith.mulf %101, %80 : vector<8x128xf32>
    %106 = arith.mulf %100, %104 : vector<8x128xf32>
    %107 = arith.addf %105, %106 : vector<8x128xf32>
    %108 = math.tanh %107 : vector<8x128xf32>
    %109 = arith.mulf %102, %108 : vector<8x128xf32>
    %110 = arith.index_cast %c3_i32 : i32 to index
    %c0_36 = arith.constant 0 : index
    %c0_37 = arith.constant 0 : index
    %111 = vector.load %arg4[%110, %c0_36, %c0_37] : memref<8x8x128xf32, #tpu.memory_space<vmem>>, vector<1x8x128xf32>
    %112 = vector.shape_cast %111 : vector<1x8x128xf32> to vector<8x128xf32>
    %113 = vector.shape_cast %109 : vector<8x128xf32> to vector<1x8x128xf32>
    tpu.vector_store %arg4[%110, %c0_36, %c0_37], %113 {strides = array<i32>} : memref<8x8x128xf32, #tpu.memory_space<vmem>>, vector<1x8x128xf32>,
    %c4_i32 = arith.constant 4 : i32
    %114 = arith.index_cast %c4_i32 : i32 to index
    %c0_38 = arith.constant 0 : index
    %c0_39 = arith.constant 0 : index
    %115 = vector.load %arg2[%114, %c0_38, %c0_39] : memref<8x8x512xf32, #tpu.memory_space<vmem>>, vector<1x8x512xf32>
    %116 = vector.shape_cast %115 : vector<1x8x512xf32> to vector<8x512xf32>
    %cst_40 = arith.constant dense<0.000000e+00> : vector<8x512xf32>
    %117 = tpu.matmul %109, %3, %cst_40 {dimension_numbers = #tpu.dot_dimension_numbers<[1], [0], [0], [1], [0, 0, 1, 1], [], []>} : vector<8x128xf32>, vector<128x512xf32>, vector<8x512xf32> -> vector<8x512xf32>
    %118 = arith.addf %116, %117 : vector<8x512xf32>
    %119 = vector.extract_strided_slice %118 {offsets = [0, 0], sizes = [8, 384], strides = [1, 1]} : vector<8x512xf32> to vector<8x384xf32>
    %cst_41 = arith.constant 5.000000e-01 : f32
    %120 = vector.broadcast %cst_41 : f32 to vector<8x384xf32>
    %121 = arith.mulf %120, %119 : vector<8x384xf32>
    %122 = math.tanh %121 : vector<8x384xf32>
    %cst_42 = arith.constant 1.000000e+00 : f32
    %123 = vector.broadcast %cst_42 : f32 to vector<8x384xf32>
    %124 = arith.addf %122, %123 : vector<8x384xf32>
    %cst_43 = arith.constant 5.000000e-01 : f32
    %125 = vector.broadcast %cst_43 : f32 to vector<8x384xf32>
    %126 = arith.mulf %125, %124 : vector<8x384xf32>
    %127 = vector.extract_strided_slice %126 {offsets = [0, 0], sizes = [8, 128], strides = [1, 1]} : vector<8x384xf32> to vector<8x128xf32>
    %128 = vector.extract_strided_slice %126 {offsets = [0, 128], sizes = [8, 128], strides = [1, 1]} : vector<8x384xf32> to vector<8x128xf32>
    %129 = vector.extract_strided_slice %126 {offsets = [0, 256], sizes = [8, 128], strides = [1, 1]} : vector<8x384xf32> to vector<8x128xf32>
    %130 = vector.extract_strided_slice %118 {offsets = [0, 384], sizes = [8, 128], strides = [1, 1]} : vector<8x512xf32> to vector<8x128xf32>
    %131 = math.tanh %130 : vector<8x128xf32>
    %132 = arith.mulf %128, %107 : vector<8x128xf32>
    %133 = arith.mulf %127, %131 : vector<8x128xf32>
    %134 = arith.addf %132, %133 : vector<8x128xf32>
    %135 = math.tanh %134 : vector<8x128xf32>
    %136 = arith.mulf %129, %135 : vector<8x128xf32>
    %137 = arith.index_cast %c4_i32 : i32 to index
    %c0_44 = arith.constant 0 : index
    %c0_45 = arith.constant 0 : index
    %138 = vector.load %arg4[%137, %c0_44, %c0_45] : memref<8x8x128xf32, #tpu.memory_space<vmem>>, vector<1x8x128xf32>
    %139 = vector.shape_cast %138 : vector<1x8x128xf32> to vector<8x128xf32>
    %140 = vector.shape_cast %136 : vector<8x128xf32> to vector<1x8x128xf32>
    tpu.vector_store %arg4[%137, %c0_44, %c0_45], %140 {strides = array<i32>} : memref<8x8x128xf32, #tpu.memory_space<vmem>>, vector<1x8x128xf32>,
    %c5_i32 = arith.constant 5 : i32
    %141 = arith.index_cast %c5_i32 : i32 to index
    %c0_46 = arith.constant 0 : index
    %c0_47 = arith.constant 0 : index
    %142 = vector.load %arg2[%141, %c0_46, %c0_47] : memref<8x8x512xf32, #tpu.memory_space<vmem>>, vector<1x8x512xf32>
    %143 = vector.shape_cast %142 : vector<1x8x512xf32> to vector<8x512xf32>
    %cst_48 = arith.constant dense<0.000000e+00> : vector<8x512xf32>
    %144 = tpu.matmul %136, %3, %cst_48 {dimension_numbers = #tpu.dot_dimension_numbers<[1], [0], [0], [1], [0, 0, 1, 1], [], []>} : vector<8x128xf32>, vector<128x512xf32>, vector<8x512xf32> -> vector<8x512xf32>
    %145 = arith.addf %143, %144 : vector<8x512xf32>
    %146 = vector.extract_strided_slice %145 {offsets = [0, 0], sizes = [8, 384], strides = [1, 1]} : vector<8x512xf32> to vector<8x384xf32>
    %cst_49 = arith.constant 5.000000e-01 : f32
    %147 = vector.broadcast %cst_49 : f32 to vector<8x384xf32>
    %148 = arith.mulf %147, %146 : vector<8x384xf32>
    %149 = math.tanh %148 : vector<8x384xf32>
    %cst_50 = arith.constant 1.000000e+00 : f32
    %150 = vector.broadcast %cst_50 : f32 to vector<8x384xf32>
    %151 = arith.addf %149, %150 : vector<8x384xf32>
    %cst_51 = arith.constant 5.000000e-01 : f32
    %152 = vector.broadcast %cst_51 : f32 to vector<8x384xf32>
    %153 = arith.mulf %152, %151 : vector<8x384xf32>
    %154 = vector.extract_strided_slice %153 {offsets = [0, 0], sizes = [8, 128], strides = [1, 1]} : vector<8x384xf32> to vector<8x128xf32>
    %155 = vector.extract_strided_slice %153 {offsets = [0, 128], sizes = [8, 128], strides = [1, 1]} : vector<8x384xf32> to vector<8x128xf32>
    %156 = vector.extract_strided_slice %153 {offsets = [0, 256], sizes = [8, 128], strides = [1, 1]} : vector<8x384xf32> to vector<8x128xf32>
    %157 = vector.extract_strided_slice %145 {offsets = [0, 384], sizes = [8, 128], strides = [1, 1]} : vector<8x512xf32> to vector<8x128xf32>
    %158 = math.tanh %157 : vector<8x128xf32>
    %159 = arith.mulf %155, %134 : vector<8x128xf32>
    %160 = arith.mulf %154, %158 : vector<8x128xf32>
    %161 = arith.addf %159, %160 : vector<8x128xf32>
    %162 = math.tanh %161 : vector<8x128xf32>
    %163 = arith.mulf %156, %162 : vector<8x128xf32>
    %164 = arith.index_cast %c5_i32 : i32 to index
    %c0_52 = arith.constant 0 : index
    %c0_53 = arith.constant 0 : index
    %165 = vector.load %arg4[%164, %c0_52, %c0_53] : memref<8x8x128xf32, #tpu.memory_space<vmem>>, vector<1x8x128xf32>
    %166 = vector.shape_cast %165 : vector<1x8x128xf32> to vector<8x128xf32>
    %167 = vector.shape_cast %163 : vector<8x128xf32> to vector<1x8x128xf32>
    tpu.vector_store %arg4[%164, %c0_52, %c0_53], %167 {strides = array<i32>} : memref<8x8x128xf32, #tpu.memory_space<vmem>>, vector<1x8x128xf32>,
    %c6_i32 = arith.constant 6 : i32
    %168 = arith.index_cast %c6_i32 : i32 to index
    %c0_54 = arith.constant 0 : index
    %c0_55 = arith.constant 0 : index
    %169 = vector.load %arg2[%168, %c0_54, %c0_55] : memref<8x8x512xf32, #tpu.memory_space<vmem>>, vector<1x8x512xf32>
    %170 = vector.shape_cast %169 : vector<1x8x512xf32> to vector<8x512xf32>
    %cst_56 = arith.constant dense<0.000000e+00> : vector<8x512xf32>
    %171 = tpu.matmul %163, %3, %cst_56 {dimension_numbers = #tpu.dot_dimension_numbers<[1], [0], [0], [1], [0, 0, 1, 1], [], []>} : vector<8x128xf32>, vector<128x512xf32>, vector<8x512xf32> -> vector<8x512xf32>
    %172 = arith.addf %170, %171 : vector<8x512xf32>
    %173 = vector.extract_strided_slice %172 {offsets = [0, 0], sizes = [8, 384], strides = [1, 1]} : vector<8x512xf32> to vector<8x384xf32>
    %cst_57 = arith.constant 5.000000e-01 : f32
    %174 = vector.broadcast %cst_57 : f32 to vector<8x384xf32>
    %175 = arith.mulf %174, %173 : vector<8x384xf32>
    %176 = math.tanh %175 : vector<8x384xf32>
    %cst_58 = arith.constant 1.000000e+00 : f32
    %177 = vector.broadcast %cst_58 : f32 to vector<8x384xf32>
    %178 = arith.addf %176, %177 : vector<8x384xf32>
    %cst_59 = arith.constant 5.000000e-01 : f32
    %179 = vector.broadcast %cst_59 : f32 to vector<8x384xf32>
    %180 = arith.mulf %179, %178 : vector<8x384xf32>
    %181 = vector.extract_strided_slice %180 {offsets = [0, 0], sizes = [8, 128], strides = [1, 1]} : vector<8x384xf32> to vector<8x128xf32>
    %182 = vector.extract_strided_slice %180 {offsets = [0, 128], sizes = [8, 128], strides = [1, 1]} : vector<8x384xf32> to vector<8x128xf32>
    %183 = vector.extract_strided_slice %180 {offsets = [0, 256], sizes = [8, 128], strides = [1, 1]} : vector<8x384xf32> to vector<8x128xf32>
    %184 = vector.extract_strided_slice %172 {offsets = [0, 384], sizes = [8, 128], strides = [1, 1]} : vector<8x512xf32> to vector<8x128xf32>
    %185 = math.tanh %184 : vector<8x128xf32>
    %186 = arith.mulf %182, %161 : vector<8x128xf32>
    %187 = arith.mulf %181, %185 : vector<8x128xf32>
    %188 = arith.addf %186, %187 : vector<8x128xf32>
    %189 = math.tanh %188 : vector<8x128xf32>
    %190 = arith.mulf %183, %189 : vector<8x128xf32>
    %191 = arith.index_cast %c6_i32 : i32 to index
    %c0_60 = arith.constant 0 : index
    %c0_61 = arith.constant 0 : index
    %192 = vector.load %arg4[%191, %c0_60, %c0_61] : memref<8x8x128xf32, #tpu.memory_space<vmem>>, vector<1x8x128xf32>
    %193 = vector.shape_cast %192 : vector<1x8x128xf32> to vector<8x128xf32>
    %194 = vector.shape_cast %190 : vector<8x128xf32> to vector<1x8x128xf32>
    tpu.vector_store %arg4[%191, %c0_60, %c0_61], %194 {strides = array<i32>} : memref<8x8x128xf32, #tpu.memory_space<vmem>>, vector<1x8x128xf32>,
    %c7_i32 = arith.constant 7 : i32
    %195 = arith.index_cast %c7_i32 : i32 to index
    %c0_62 = arith.constant 0 : index
    %c0_63 = arith.constant 0 : index
    %196 = vector.load %arg2[%195, %c0_62, %c0_63] : memref<8x8x512xf32, #tpu.memory_space<vmem>>, vector<1x8x512xf32>
    %197 = vector.shape_cast %196 : vector<1x8x512xf32> to vector<8x512xf32>
    %cst_64 = arith.constant dense<0.000000e+00> : vector<8x512xf32>
    %198 = tpu.matmul %190, %3, %cst_64 {dimension_numbers = #tpu.dot_dimension_numbers<[1], [0], [0], [1], [0, 0, 1, 1], [], []>} : vector<8x128xf32>, vector<128x512xf32>, vector<8x512xf32> -> vector<8x512xf32>
    %199 = arith.addf %197, %198 : vector<8x512xf32>
    %200 = vector.extract_strided_slice %199 {offsets = [0, 0], sizes = [8, 384], strides = [1, 1]} : vector<8x512xf32> to vector<8x384xf32>
    %cst_65 = arith.constant 5.000000e-01 : f32
    %201 = vector.broadcast %cst_65 : f32 to vector<8x384xf32>
    %202 = arith.mulf %201, %200 : vector<8x384xf32>
    %203 = math.tanh %202 : vector<8x384xf32>
    %cst_66 = arith.constant 1.000000e+00 : f32
    %204 = vector.broadcast %cst_66 : f32 to vector<8x384xf32>
    %205 = arith.addf %203, %204 : vector<8x384xf32>
    %cst_67 = arith.constant 5.000000e-01 : f32
    %206 = vector.broadcast %cst_67 : f32 to vector<8x384xf32>
    %207 = arith.mulf %206, %205 : vector<8x384xf32>
    %208 = vector.extract_strided_slice %207 {offsets = [0, 0], sizes = [8, 128], strides = [1, 1]} : vector<8x384xf32> to vector<8x128xf32>
    %209 = vector.extract_strided_slice %207 {offsets = [0, 128], sizes = [8, 128], strides = [1, 1]} : vector<8x384xf32> to vector<8x128xf32>
    %210 = vector.extract_strided_slice %207 {offsets = [0, 256], sizes = [8, 128], strides = [1, 1]} : vector<8x384xf32> to vector<8x128xf32>
    %211 = vector.extract_strided_slice %199 {offsets = [0, 384], sizes = [8, 128], strides = [1, 1]} : vector<8x512xf32> to vector<8x128xf32>
    %212 = math.tanh %211 : vector<8x128xf32>
    %213 = arith.mulf %209, %188 : vector<8x128xf32>
    %214 = arith.mulf %208, %212 : vector<8x128xf32>
    %215 = arith.addf %213, %214 : vector<8x128xf32>
    %216 = math.tanh %215 : vector<8x128xf32>
    %217 = arith.mulf %210, %216 : vector<8x128xf32>
    %218 = arith.index_cast %c7_i32 : i32 to index
    %c0_68 = arith.constant 0 : index
    %c0_69 = arith.constant 0 : index
    %219 = vector.load %arg4[%218, %c0_68, %c0_69] : memref<8x8x128xf32, #tpu.memory_space<vmem>>, vector<1x8x128xf32>
    %220 = vector.shape_cast %219 : vector<1x8x128xf32> to vector<8x128xf32>
    %221 = vector.shape_cast %217 : vector<8x128xf32> to vector<1x8x128xf32>
    tpu.vector_store %arg4[%218, %c0_68, %c0_69], %221 {strides = array<i32>} : memref<8x8x128xf32, #tpu.memory_space<vmem>>, vector<1x8x128xf32>,
    %c8_i32 = arith.constant 8 : i32
    %c0_70 = arith.constant 0 : index
    %c0_71 = arith.constant 0 : index
    %222 = vector.load %arg5[%c0_70, %c0_71] : memref<8x128xf32, #tpu.memory_space<vmem>>, vector<8x128xf32>
    tpu.vector_store %arg5[%c0_70, %c0_71], %217 {strides = array<i32>} : memref<8x128xf32, #tpu.memory_space<vmem>>, vector<8x128xf32>,
    %c0_72 = arith.constant 0 : index
    %c0_73 = arith.constant 0 : index
    %223 = vector.load %arg6[%c0_72, %c0_73] : memref<8x128xf32, #tpu.memory_space<vmem>>, vector<8x128xf32>
    tpu.vector_store %arg6[%c0_72, %c0_73], %215 {strides = array<i32>} : memref<8x128xf32, #tpu.memory_space<vmem>>, vector<8x128xf32>,
    return
  }
  func.func @transform_0(%arg0: i32, %arg1: i32) -> (i32, i32, i32) {
    %c0_i32 = arith.constant 0 : i32
    %c0_i32_0 = arith.constant 0 : i32
    return %arg1, %arg0, %c0_i32 : i32, i32, i32
  }
  func.func @transform_1(%arg0: i32, %arg1: i32) -> (i32, i32) {
    %c0_i32 = arith.constant 0 : i32
    %c0_i32_0 = arith.constant 0 : i32
    %c0_i32_1 = arith.constant 0 : i32
    return %c0_i32, %c0_i32_0 : i32, i32
  }
  func.func @transform_2(%arg0: i32, %arg1: i32) -> (i32, i32, i32) {
    %c0_i32 = arith.constant 0 : i32
    %c0_i32_0 = arith.constant 0 : i32
    return %arg1, %arg0, %c0_i32 : i32, i32, i32
  }
}

module attributes {stable_mosaic.version = 11 : i64} {
  func.func @bn_proj_kernel(%arg0: i32, %arg1: memref<64x128xf32, #tpu.memory_space<vmem>>, %arg2: memref<128x512xf32, #tpu.memory_space<vmem>>, %arg3: memref<1x512xf32, #tpu.memory_space<vmem>>, %arg4: memref<64x512xf32, #tpu.memory_space<vmem>>) attributes {dimension_semantics = [#tpu.dimension_semantics<parallel>], iteration_bounds = array<i64: 1>, scalar_prefetch = 0 : i64, scratch_operands = 0 : i64, tpu.core_type = #tpu.core_type<tc>, window_params = [{transform_indices = @transform_0, window_bounds = array<i64: 64, 128>}, {pipeline_mode = #tpu.pipeline_mode<synchronous>, transform_indices = @transform_1, window_bounds = array<i64: 128, 512>}, {pipeline_mode = #tpu.pipeline_mode<synchronous>, transform_indices = @transform_2, window_bounds = array<i64: 1, 512>}, {transform_indices = @transform_3, window_bounds = array<i64: 64, 512>}]} {
    %c0 = arith.constant 0 : index
    %c0_0 = arith.constant 0 : index
    %0 = vector.load %arg1[%c0, %c0_0] : memref<64x128xf32, #tpu.memory_space<vmem>>, vector<64x128xf32>
    %c0_1 = arith.constant 0 : index
    %c0_2 = arith.constant 0 : index
    %1 = vector.load %arg2[%c0_1, %c0_2] : memref<128x512xf32, #tpu.memory_space<vmem>>, vector<128x512xf32>
    %cst = arith.constant dense<0.000000e+00> : vector<64x512xf32>
    %2 = tpu.matmul %0, %1, %cst {dimension_numbers = #tpu.dot_dimension_numbers<[1], [0], [0], [1], [0, 0, 1, 1], [], []>} : vector<64x128xf32>, vector<128x512xf32>, vector<64x512xf32> -> vector<64x512xf32>
    %c0_3 = arith.constant 0 : index
    %c0_4 = arith.constant 0 : index
    %3 = vector.load %arg3[%c0_3, %c0_4] : memref<1x512xf32, #tpu.memory_space<vmem>>, vector<1x512xf32>
    %4 = vector.broadcast %3 : vector<1x512xf32> to vector<64x512xf32>
    %5 = arith.addf %2, %4 : vector<64x512xf32>
    %c0_5 = arith.constant 0 : index
    %c0_6 = arith.constant 0 : index
    %6 = vector.load %arg4[%c0_5, %c0_6] : memref<64x512xf32, #tpu.memory_space<vmem>>, vector<64x512xf32>
    tpu.vector_store %arg4[%c0_5, %c0_6], %5 {strides = array<i32>} : memref<64x512xf32, #tpu.memory_space<vmem>>, vector<64x512xf32>,
    return
  }
  func.func @transform_0(%arg0: i32) -> (i32, i32) {
    %c0_i32 = arith.constant 0 : i32
    %c0_i32_0 = arith.constant 0 : i32
    return %arg0, %c0_i32 : i32, i32
  }
  func.func @transform_1(%arg0: i32) -> (i32, i32) {
    %c0_i32 = arith.constant 0 : i32
    %c0_i32_0 = arith.constant 0 : i32
    %c0_i32_1 = arith.constant 0 : i32
    return %c0_i32, %c0_i32_0 : i32, i32
  }
  func.func @transform_2(%arg0: i32) -> (i32, i32) {
    %c0_i32 = arith.constant 0 : i32
    %c0_i32_0 = arith.constant 0 : i32
    %c0_i32_1 = arith.constant 0 : i32
    return %c0_i32, %c0_i32_0 : i32, i32
  }
  func.func @transform_3(%arg0: i32) -> (i32, i32) {
    %c0_i32 = arith.constant 0 : i32
    %c0_i32_0 = arith.constant 0 : i32
    return %arg0, %c0_i32 : i32, i32
  }
}

</mosaic_0001>

<llo_original>
// kernel: batch_rnn_forward.3
$region0: #{batch_rnn_forward.3}
  #allocation0 [shape = 'u32[]', space=smem, size = 0x4, offset = 0x4, fixed_abs, tag = 'smem constant byte address 0x4 - core index']
  #allocation1 [shape = 'u32[144,128]{1,0:T(1,128)}', space=vmem, size = 0x12000, scoped, tag = 'internal scratch']
  %s0 = inlined_call_operand.vmem [shape: f32[64,128], index: 0, kind: input, shape index: {}]
  %s1 = inlined_call_operand.vmem [shape: f32[8,128], index: 1, kind: output, shape index: {}]
  %s2 = sld [smem:[#allocation0]]
  $region18: #{batch_rnn_forward.3} parent=0
    _
  %s4 = ssub.s32 1, %s2
  %s5 = scalar_select 0, %s4, %s2
  // Predicated region
  $region2: #{batch_rnn_forward.3} parent=0 // pred_check
    _
  $region3: #{batch_rnn_forward.3} parent=0 // pred_check_branch
    %7 = sbr.rel (0) target = $region5
  $region4: #{batch_rnn_forward.3} parent=0 // pred_region
    %s8 = sadd.s32 0, 0
    %s9 = smul.u32 8, %s8
    %p10 = scmp.lt.s32.totalorder %s9, 7
    %s11 = scalar_select %p10, %s9, 7
    %s12 = smul.addr %s11, 8
    %s13 = scalar_lea.vmem %s0, %s12
    %s14 = sadd.s32 0, 0
    %s15 = smul.u32 8, %s14
  $region5: #{batch_rnn_forward.3} parent=0 // pred_fallthru
    _
  %s16 = sadd.s32 0, 0
  %s17 = smul.u32 8, %s16
  %p18 = scmp.lt.s32.totalorder %s17, 7
  %s19 = scalar_select %p18, %s17, 7
  %s20 = smul.addr %s19, 8
  %s21 = scalar_lea.vmem %s0, %s20
  %s22 = sadd.s32 0, 0
  %s23 = smul.u32 8, %s22
  %p24 = scmp.lt.s32.totalorder %s23, 7
  %s25 = scalar_select %p24, %s23, 7
  %s26 = smul.addr %s25, 8
  %s27 = scalar_lea.vmem %s0, %s26
  %s28 = sadd.s32 0, 0
  %s29 = smul.u32 8, %s28
  %p30 = scmp.eq.s32.totalorder 0, 0
  // Predicated region
  $region6: #{batch_rnn_forward.3} parent=0 // pred_check
    %p31 = pneg %p30
  $region7: #{batch_rnn_forward.3} parent=0 // pred_check_branch
    %33 = sbr.rel (%p31) target = $region9
  $region8: #{batch_rnn_forward.3} parent=0 // pred_region
    %34 = vst [vmem:[%s1] sm:$0xff] 0.0
  $region9: #{batch_rnn_forward.3} parent=0 // pred_fallthru
    _
  %v35 = vld [vmem:[%s27] sm:$0xff]
  %v36 = vld [vmem:[%s27 + $0x8] sm:$0xff]
  %v37 = vld [vmem:[%s27 + $0x10] sm:$0xff]
  %v38 = vld [vmem:[%s27 + $0x18] sm:$0xff]
  %v39 = vld [vmem:[%s27 + $0x20] sm:$0xff]
  %v40 = vld [vmem:[%s27 + $0x28] sm:$0xff]
  %v41 = vld [vmem:[%s27 + $0x30] sm:$0xff]
  %v42 = vld [vmem:[%s27 + $0x38] sm:$0xff]
  %v43 = vadd.f32 %v35, %v36
  %v44 = vadd.f32 %v43, %v37
  %v45 = vadd.f32 %v44, %v38
  %v46 = vadd.f32 %v45, %v39
  %v47 = vadd.f32 %v46, %v40
  %v48 = vadd.f32 %v47, %v41
  %v49 = vadd.f32 %v48, %v42
  %v50 = vrot.slane %v49, 4
  %v51 = vadd.f32 %v49, %v50
  %v52 = vrot.slane %v51, 2
  %v53 = vadd.f32 %v51, %v52
  %v54 = vrot.slane %v53, 1
  %v55 = vadd.f32 %v53, %v54
  %v56 = vmul.f32 %v35, %v35
  %v57 = vmul.f32 %v36, %v36
  %v58 = vmul.f32 %v37, %v37
  %v59 = vmul.f32 %v38, %v38
  %v60 = vmul.f32 %v39, %v39
  %v61 = vmul.f32 %v40, %v40
  %v62 = vmul.f32 %v41, %v41
  %v63 = vmul.f32 %v42, %v42
  %v64 = vadd.f32 %v56, %v57
  %v65 = vadd.f32 %v64, %v58
  %v66 = vadd.f32 %v65, %v59
  %v67 = vadd.f32 %v66, %v60
  %v68 = vadd.f32 %v67, %v61
  %v69 = vadd.f32 %v68, %v62
  %v70 = vadd.f32 %v69, %v63
  %v71 = vrot.slane %v70, 4
  %v72 = vadd.f32 %v70, %v71
  %v73 = vrot.slane %v72, 2
  %v74 = vadd.f32 %v72, %v73
  %v75 = vrot.slane %v74, 1
  %v76 = vadd.f32 %v74, %v75
  %v77 = vld [vmem:[%s1] sm:$0xff]
  %vm78 = vcmask 1040384
  %v79 = vsel %vm78, %v55, %v76
  %vm80 = vcmask 1041408
  %v81 = vsel %vm80, %v79, 0.0
  %v82 = vadd.f32 %v77, %v81
  %83 = vst [vmem:[%s1] sm:$0xff] %v82
  // Predicated region
  $region10: #{batch_rnn_forward.3} parent=0 // pred_check
    _
  $region11: #{batch_rnn_forward.3} parent=0 // pred_check_branch
    %85 = sbr.rel (0) target = $region13
  $region12: #{batch_rnn_forward.3} parent=0 // pred_region
    _
  $region13: #{batch_rnn_forward.3} parent=0 // pred_fallthru
    _
  // Predicated region
  $region14: #{batch_rnn_forward.3} parent=0 // pred_check
    _
  $region15: #{batch_rnn_forward.3} parent=0 // pred_check_branch
    %87 = sbr.rel (0) target = $region17
  $region16: #{batch_rnn_forward.3} parent=0 // pred_region
    _
  $region17: #{batch_rnn_forward.3} parent=0 // pred_fallthru
    _

// kernel: batch_rnn_forward.4
$region0: #{batch_rnn_forward.4}
  #allocation0 [shape = 'u32[]', space=smem, size = 0x4, offset = 0x4, fixed_abs, tag = 'smem constant byte address 0x4 - core index']
  #allocation1 [shape = 'u32[144,128]{1,0:T(1,128)}', space=vmem, size = 0x12000, scoped, tag = 'internal scratch']
  %s0 = inlined_call_operand.vmem [shape: f32[64,128], index: 0, kind: input, shape index: {}]
  %s1 = inlined_call_operand.vmem [shape: f32[128,512], index: 1, kind: input, shape index: {}]
  %s2 = inlined_call_operand.vmem [shape: f32[1,512], index: 2, kind: input, shape index: {}]
  %s3 = inlined_call_operand.vmem [shape: f32[64,512], index: 3, kind: output, shape index: {}]
  %s4 = sld [smem:[#allocation0]]
  $region22: #{batch_rnn_forward.4} parent=0
    _
  %s6 = ssub.s32 1, %s4
  %s7 = scalar_select 0, %s6, %s4
  // Predicated region
  $region2: #{batch_rnn_forward.4} parent=0 // pred_check
    _
  $region3: #{batch_rnn_forward.4} parent=0 // pred_check_branch
    %9 = sbr.rel (0) target = $region5
  $region4: #{batch_rnn_forward.4} parent=0 // pred_region
    _
  $region5: #{batch_rnn_forward.4} parent=0 // pred_fallthru
    _
  // Predicated region
  $region6: #{batch_rnn_forward.4} parent=0 // pred_check
    _
  $region7: #{batch_rnn_forward.4} parent=0 // pred_check_branch
    %11 = sbr.rel (0) target = $region9
  $region8: #{batch_rnn_forward.4} parent=0 // pred_region
    _
  $region9: #{batch_rnn_forward.4} parent=0 // pred_fallthru
    _
  // Predicated region
  $region10: #{batch_rnn_forward.4} parent=0 // pred_check
    _
  $region11: #{batch_rnn_forward.4} parent=0 // pred_check_branch
    %13 = sbr.rel (0) target = $region13
  $region12: #{batch_rnn_forward.4} parent=0 // pred_region
    _
  $region13: #{batch_rnn_forward.4} parent=0 // pred_fallthru
    _
  %v14 = vld [vmem:[%s0] sm:$0xff]
  %v15 = vld [vmem:[%s0 + $0x8] sm:$0xff]
  %v16 = vld [vmem:[%s0 + $0x10] sm:$0xff]
  %v17 = vld [vmem:[%s0 + $0x18] sm:$0xff]
  %v18 = vld [vmem:[%s0 + $0x20] sm:$0xff]
  %v19 = vld [vmem:[%s0 + $0x28] sm:$0xff]
  %v20 = vld [vmem:[%s0 + $0x30] sm:$0xff]
  %v21 = vld [vmem:[%s0 + $0x38] sm:$0xff]
  %v22 = vld [vmem:[%s1] sm:$0xff]
  %v23 = vld [vmem:[%s1 + $0x8] sm:$0xff]
  %v24 = vld [vmem:[%s1 + $0x10] sm:$0xff]
  %v25 = vld [vmem:[%s1 + $0x18] sm:$0xff]
  %v26 = vld [vmem:[%s1 + $0x20] sm:$0xff]
  %v27 = vld [vmem:[%s1 + $0x28] sm:$0xff]
  %v28 = vld [vmem:[%s1 + $0x30] sm:$0xff]
  %v29 = vld [vmem:[%s1 + $0x38] sm:$0xff]
  %v30 = vld [vmem:[%s1 + $0x40] sm:$0xff]
  %v31 = vld [vmem:[%s1 + $0x48] sm:$0xff]
  %v32 = vld [vmem:[%s1 + $0x50] sm:$0xff]
  %v33 = vld [vmem:[%s1 + $0x58] sm:$0xff]
  %v34 = vld [vmem:[%s1 + $0x60] sm:$0xff]
  %v35 = vld [vmem:[%s1 + $0x68] sm:$0xff]
  %v36 = vld [vmem:[%s1 + $0x70] sm:$0xff]
  %v37 = vld [vmem:[%s1 + $0x78] sm:$0xff]
  %v38 = vld [vmem:[%s1 + $0x80] sm:$0xff]
  %v39 = vld [vmem:[%s1 + $0x88] sm:$0xff]
  %v40 = vld [vmem:[%s1 + $0x90] sm:$0xff]
  %v41 = vld [vmem:[%s1 + $0x98] sm:$0xff]
  %v42 = vld [vmem:[%s1 + $0xa0] sm:$0xff]
  %v43 = vld [vmem:[%s1 + $0xa8] sm:$0xff]
  %v44 = vld [vmem:[%s1 + $0xb0] sm:$0xff]
  %v45 = vld [vmem:[%s1 + $0xb8] sm:$0xff]
  %v46 = vld [vmem:[%s1 + $0xc0] sm:$0xff]
  %v47 = vld [vmem:[%s1 + $0xc8] sm:$0xff]
  %v48 = vld [vmem:[%s1 + $0xd0] sm:$0xff]
  %v49 = vld [vmem:[%s1 + $0xd8] sm:$0xff]
  %v50 = vld [vmem:[%s1 + $0xe0] sm:$0xff]
  %v51 = vld [vmem:[%s1 + $0xe8] sm:$0xff]
  %v52 = vld [vmem:[%s1 + $0xf0] sm:$0xff]
  %v53 = vld [vmem:[%s1 + $0xf8] sm:$0xff]
  %v54 = vld [vmem:[%s1 + $0x100] sm:$0xff]
  %v55 = vld [vmem:[%s1 + $0x108] sm:$0xff]
  %v56 = vld [vmem:[%s1 + $0x110] sm:$0xff]
  %v57 = vld [vmem:[%s1 + $0x118] sm:$0xff]
  %v58 = vld [vmem:[%s1 + $0x120] sm:$0xff]
  %v59 = vld [vmem:[%s1 + $0x128] sm:$0xff]
  %v60 = vld [vmem:[%s1 + $0x130] sm:$0xff]
  %v61 = vld [vmem:[%s1 + $0x138] sm:$0xff]
  %v62 = vld [vmem:[%s1 + $0x140] sm:$0xff]
  %v63 = vld [vmem:[%s1 + $0x148] sm:$0xff]
  %v64 = vld [vmem:[%s1 + $0x150] sm:$0xff]
  %v65 = vld [vmem:[%s1 + $0x158] sm:$0xff]
  %v66 = vld [vmem:[%s1 + $0x160] sm:$0xff]
  %v67 = vld [vmem:[%s1 + $0x168] sm:$0xff]
  %v68 = vld [vmem:[%s1 + $0x170] sm:$0xff]
  %v69 = vld [vmem:[%s1 + $0x178] sm:$0xff]
  %v70 = vld [vmem:[%s1 + $0x180] sm:$0xff]
  %v71 = vld [vmem:[%s1 + $0x188] sm:$0xff]
  %v72 = vld [vmem:[%s1 + $0x190] sm:$0xff]
  %v73 = vld [vmem:[%s1 + $0x198] sm:$0xff]
  %v74 = vld [vmem:[%s1 + $0x1a0] sm:$0xff]
  %v75 = vld [vmem:[%s1 + $0x1a8] sm:$0xff]
  %v76 = vld [vmem:[%s1 + $0x1b0] sm:$0xff]
  %v77 = vld [vmem:[%s1 + $0x1b8] sm:$0xff]
  %v78 = vld [vmem:[%s1 + $0x1c0] sm:$0xff]
  %v79 = vld [vmem:[%s1 + $0x1c8] sm:$0xff]
  %v80 = vld [vmem:[%s1 + $0x1d0] sm:$0xff]
  %v81 = vld [vmem:[%s1 + $0x1d8] sm:$0xff]
  %v82 = vld [vmem:[%s1 + $0x1e0] sm:$0xff]
  %v83 = vld [vmem:[%s1 + $0x1e8] sm:$0xff]
  %v84 = vld [vmem:[%s1 + $0x1f0] sm:$0xff]
  %v85 = vld [vmem:[%s1 + $0x1f8] sm:$0xff]
  %v86 = vld [vmem:[%s2] sm:$0xf]
  %v88 = vlaneseq
  %v89 = vshrl.u32 %v88, 7
  %v90 = vsub.s32 0, %v89
  %v91 = vrot.slane %v86, %v90
  %v92 = vlaneseq
  %v93 = vshrl.u32 %v92, 7
  %v94 = vsub.s32 1, %v93
  %v95 = vrot.slane %v86, %v94
  %v96 = vlaneseq
  %v97 = vshrl.u32 %v96, 7
  %v98 = vsub.s32 2, %v97
  %v99 = vrot.slane %v86, %v98
  %v100 = vlaneseq
  %v101 = vshrl.u32 %v100, 7
  %v102 = vsub.s32 3, %v101
  %v103 = vrot.slane %v86, %v102
  %108 = vmatprep.subr.mxu0 %v83
  %109 = vmatpush1.msra.mxu0 %v82
  %110 = vmatprep.subr.mxu0 %v79
  %111 = vmatpush1.msra.mxu0 %v78
  %112 = vmatprep.subr.mxu0 %v75
  %113 = vmatpush1.msra.mxu0 %v74
  %114 = vmatprep.subr.mxu0 %v71
  %115 = vmatpush1.msra.mxu0 %v70
  %116 = vmatprep.subr.mxu0 %v67
  %117 = vmatpush1.msra.mxu0 %v66
  %118 = vmatprep.subr.mxu0 %v63
  %119 = vmatpush1.msra.mxu0 %v62
  %120 = vmatprep.subr.mxu0 %v59
  %121 = vmatpush1.msra.mxu0 %v58
  %122 = vmatprep.subr.mxu0 %v55
  %123 = vmatpush1.msra.mxu0 %v54
  %124 = vmatprep.subr.mxu0 %v51
  %125 = vmatpush1.msra.mxu0 %v50
  %126 = vmatprep.subr.mxu0 %v47
  %127 = vmatpush1.msra.mxu0 %v46
  %128 = vmatprep.subr.mxu0 %v43
  %129 = vmatpush1.msra.mxu0 %v42
  %130 = vmatprep.subr.mxu0 %v39
  %131 = vmatpush1.msra.mxu0 %v38
  %132 = vmatprep.subr.mxu0 %v35
  %133 = vmatpush1.msra.mxu0 %v34
  %134 = vmatprep.subr.mxu0 %v31
  %135 = vmatpush1.msra.mxu0 %v30
  %136 = vmatprep.subr.mxu0 %v27
  %137 = vmatpush1.msra.mxu0 %v26
  %138 = vmatprep.subr.mxu0 %v23
  %139 = vmatpush1.msra.mxu0 %v22
  %140 = vmatprep.subr.mxu0 0.0
  %141 = vmatpush2.msra.mxu0 0.0
  %142 = vmatprep.subr.mxu0 0.0
  %143 = vmatpush2.msra.mxu0 0.0
  %144 = vmatprep.subr.mxu0 0.0
  %145 = vmatpush2.msra.mxu0 0.0
  %146 = vmatprep.subr.mxu0 0.0
  %147 = vmatpush2.msra.mxu0 0.0
  %148 = vmatprep.subr.mxu0 0.0
  %149 = vmatpush2.msra.mxu0 0.0
  %150 = vmatprep.subr.mxu0 0.0
  %151 = vmatpush2.msra.mxu0 0.0
  %152 = vmatprep.subr.mxu0 0.0
  %153 = vmatpush2.msra.mxu0 0.0
  %154 = vmatprep.subr.mxu0 0.0
  %155 = vmatpush2.msra.mxu0 0.0
  %156 = vmatprep.subr.mxu0 0.0
  %157 = vmatpush2.msra.mxu0 0.0
  %158 = vmatprep.subr.mxu0 0.0
  %159 = vmatpush2.msra.mxu0 0.0
  %160 = vmatprep.subr.mxu0 0.0
  %161 = vmatpush2.msra.mxu0 0.0
  %162 = vmatprep.subr.mxu0 0.0
  %163 = vmatpush2.msra.mxu0 0.0
  %164 = vmatprep.subr.mxu0 0.0
  %165 = vmatpush2.msra.mxu0 0.0
  %166 = vmatprep.subr.mxu0 0.0
  %167 = vmatpush2.msra.mxu0 0.0
  %168 = vmatprep.subr.mxu0 0.0
  %169 = vmatpush2.msra.mxu0 0.0
  %170 = vmatprep.subr.mxu0 0.0
  %171 = vmatpush2.msra.mxu0 0.0
  %172 = vmatprep.mubr.f32.mxu0 0.0
  %173 = vmatmul.mubr.f32.gmra.mxu0 %v14
  %v174 = vpop.f32.mrf.mxu0
  %v175 = vadd.f32 %v91, %v174
  %v176 = vpop.f32.mrf.mxu0
  %v177 = vadd.f32 %v95, %v176
  %178 = vmatprep.mubr.f32.mxu0 0.0
  %179 = vmatmul.mubr.f32.gmra.mxu0 %v15
  %v180 = vpop.f32.mrf.mxu0
  %v181 = vadd.f32 %v91, %v180
  %v182 = vpop.f32.mrf.mxu0
  %v183 = vadd.f32 %v95, %v182
  %184 = vmatprep.mubr.f32.mxu0 0.0
  %185 = vmatmul.mubr.f32.gmra.mxu0 %v16
  %v186 = vpop.f32.mrf.mxu0
  %v187 = vadd.f32 %v91, %v186
  %v188 = vpop.f32.mrf.mxu0
  %v189 = vadd.f32 %v95, %v188
  %190 = vmatprep.mubr.f32.mxu0 0.0
  %191 = vmatmul.mubr.f32.gmra.mxu0 %v17
  %v192 = vpop.f32.mrf.mxu0
  %v193 = vadd.f32 %v91, %v192
  %v194 = vpop.f32.mrf.mxu0
  %v195 = vadd.f32 %v95, %v194
  %196 = vmatprep.mubr.f32.mxu0 0.0
  %197 = vmatmul.mubr.f32.gmra.mxu0 %v18
  %v198 = vpop.f32.mrf.mxu0
  %v199 = vadd.f32 %v91, %v198
  %v200 = vpop.f32.mrf.mxu0
  %v201 = vadd.f32 %v95, %v200
  %202 = vmatprep.mubr.f32.mxu0 0.0
  %203 = vmatmul.mubr.f32.gmra.mxu0 %v19
  %v204 = vpop.f32.mrf.mxu0
  %v205 = vadd.f32 %v91, %v204
  %v206 = vpop.f32.mrf.mxu0
  %v207 = vadd.f32 %v95, %v206
  %208 = vmatprep.mubr.f32.mxu0 0.0
  %209 = vmatmul.mubr.f32.gmra.mxu0 %v20
  %v210 = vpop.f32.mrf.mxu0
  %v211 = vadd.f32 %v91, %v210
  %v212 = vpop.f32.mrf.mxu0
  %v213 = vadd.f32 %v95, %v212
  %214 = vmatprep.mubr.f32.mxu0 0.0
  %215 = vmatmul.mubr.f32.gmra.mxu0 %v21
  %v216 = vpop.f32.mrf.mxu0
  %v217 = vadd.f32 %v91, %v216
  %v218 = vpop.f32.mrf.mxu0
  %v219 = vadd.f32 %v95, %v218
  %220 = vdwg.mxu0
  %221 = vmatprep.subr.mxu0 %v85
  %222 = vmatpush1.msra.mxu0 %v84
  %223 = vmatprep.subr.mxu0 %v81
  %224 = vmatpush1.msra.mxu0 %v80
  %225 = vmatprep.subr.mxu0 %v77
  %226 = vmatpush1.msra.mxu0 %v76
  %227 = vmatprep.subr.mxu0 %v73
  %228 = vmatpush1.msra.mxu0 %v72
  %229 = vmatprep.subr.mxu0 %v69
  %230 = vmatpush1.msra.mxu0 %v68
  %231 = vmatprep.subr.mxu0 %v65
  %232 = vmatpush1.msra.mxu0 %v64
  %233 = vmatprep.subr.mxu0 %v61
  %234 = vmatpush1.msra.mxu0 %v60
  %235 = vmatprep.subr.mxu0 %v57
  %236 = vmatpush1.msra.mxu0 %v56
  %237 = vmatprep.subr.mxu0 %v53
  %238 = vmatpush1.msra.mxu0 %v52
  %239 = vmatprep.subr.mxu0 %v49
  %240 = vmatpush1.msra.mxu0 %v48
  %241 = vmatprep.subr.mxu0 %v45
  %242 = vmatpush1.msra.mxu0 %v44
  %243 = vmatprep.subr.mxu0 %v41
  %244 = vmatpush1.msra.mxu0 %v40
  %245 = vmatprep.subr.mxu0 %v37
  %246 = vmatpush1.msra.mxu0 %v36
  %247 = vmatprep.subr.mxu0 %v33
  %248 = vmatpush1.msra.mxu0 %v32
  %249 = vmatprep.subr.mxu0 %v29
  %250 = vmatpush1.msra.mxu0 %v28
  %251 = vmatprep.subr.mxu0 %v25
  %252 = vmatpush1.msra.mxu0 %v24
  %253 = vmatprep.subr.mxu0 0.0
  %254 = vmatpush2.msra.mxu0 0.0
  %255 = vmatprep.subr.mxu0 0.0
  %256 = vmatpush2.msra.mxu0 0.0
  %257 = vmatprep.subr.mxu0 0.0
  %258 = vmatpush2.msra.mxu0 0.0
  %259 = vmatprep.subr.mxu0 0.0
  %260 = vmatpush2.msra.mxu0 0.0
  %261 = vmatprep.subr.mxu0 0.0
  %262 = vmatpush2.msra.mxu0 0.0
  %263 = vmatprep.subr.mxu0 0.0
  %264 = vmatpush2.msra.mxu0 0.0
  %265 = vmatprep.subr.mxu0 0.0
  %266 = vmatpush2.msra.mxu0 0.0
  %267 = vmatprep.subr.mxu0 0.0
  %268 = vmatpush2.msra.mxu0 0.0
  %269 = vmatprep.subr.mxu0 0.0
  %270 = vmatpush2.msra.mxu0 0.0
  %271 = vmatprep.subr.mxu0 0.0
  %272 = vmatpush2.msra.mxu0 0.0
  %273 = vmatprep.subr.mxu0 0.0
  %274 = vmatpush2.msra.mxu0 0.0
  %275 = vmatprep.subr.mxu0 0.0
  %276 = vmatpush2.msra.mxu0 0.0
  %277 = vmatprep.subr.mxu0 0.0
  %278 = vmatpush2.msra.mxu0 0.0
  %279 = vmatprep.subr.mxu0 0.0
  %280 = vmatpush2.msra.mxu0 0.0
  %281 = vmatprep.subr.mxu0 0.0
  %282 = vmatpush2.msra.mxu0 0.0
  %283 = vmatprep.subr.mxu0 0.0
  %284 = vmatpush2.msra.mxu0 0.0
  %285 = vmatprep.mubr.f32.mxu0 0.0
  %286 = vmatmul.mubr.f32.gmra.mxu0 %v14
  %v287 = vpop.f32.mrf.mxu0
  %v288 = vadd.f32 %v99, %v287
  %v289 = vpop.f32.mrf.mxu0
  %v290 = vadd.f32 %v103, %v289
  %291 = vmatprep.mubr.f32.mxu0 0.0
  %292 = vmatmul.mubr.f32.gmra.mxu0 %v15
  %v293 = vpop.f32.mrf.mxu0
  %v294 = vadd.f32 %v99, %v293
  %v295 = vpop.f32.mrf.mxu0
  %v296 = vadd.f32 %v103, %v295
  %297 = vmatprep.mubr.f32.mxu0 0.0
  %298 = vmatmul.mubr.f32.gmra.mxu0 %v16
  %v299 = vpop.f32.mrf.mxu0
  %v300 = vadd.f32 %v99, %v299
  %v301 = vpop.f32.mrf.mxu0
  %v302 = vadd.f32 %v103, %v301
  %303 = vmatprep.mubr.f32.mxu0 0.0
  %304 = vmatmul.mubr.f32.gmra.mxu0 %v17
  %v305 = vpop.f32.mrf.mxu0
  %v306 = vadd.f32 %v99, %v305
  %v307 = vpop.f32.mrf.mxu0
  %v308 = vadd.f32 %v103, %v307
  %309 = vmatprep.mubr.f32.mxu0 0.0
  %310 = vmatmul.mubr.f32.gmra.mxu0 %v18
  %v311 = vpop.f32.mrf.mxu0
  %v312 = vadd.f32 %v99, %v311
  %v313 = vpop.f32.mrf.mxu0
  %v314 = vadd.f32 %v103, %v313
  %315 = vmatprep.mubr.f32.mxu0 0.0
  %316 = vmatmul.mubr.f32.gmra.mxu0 %v19
  %v317 = vpop.f32.mrf.mxu0
  %v318 = vadd.f32 %v99, %v317
  %v319 = vpop.f32.mrf.mxu0
  %v320 = vadd.f32 %v103, %v319
  %321 = vmatprep.mubr.f32.mxu0 0.0
  %322 = vmatmul.mubr.f32.gmra.mxu0 %v20
  %v323 = vpop.f32.mrf.mxu0
  %v324 = vadd.f32 %v99, %v323
  %v325 = vpop.f32.mrf.mxu0
  %v326 = vadd.f32 %v103, %v325
  %327 = vmatprep.mubr.f32.mxu0 0.0
  %328 = vmatmul.mubr.f32.gmra.mxu0 %v21
  %v329 = vpop.f32.mrf.mxu0
  %v330 = vadd.f32 %v99, %v329
  %v331 = vpop.f32.mrf.mxu0
  %v332 = vadd.f32 %v103, %v331
  %333 = vdwg.mxu0
  %334 = vst [vmem:[%s3] sm:$0xff] %v175
  %335 = vst [vmem:[%s3 + $0x8] sm:$0xff] %v177
  %336 = vst [vmem:[%s3 + $0x10] sm:$0xff] %v288
  %337 = vst [vmem:[%s3 + $0x18] sm:$0xff] %v290
  %338 = vst [vmem:[%s3 + $0x20] sm:$0xff] %v181
  %339 = vst [vmem:[%s3 + $0x28] sm:$0xff] %v183
  %340 = vst [vmem:[%s3 + $0x30] sm:$0xff] %v294
  %341 = vst [vmem:[%s3 + $0x38] sm:$0xff] %v296
  %342 = vst [vmem:[%s3 + $0x40] sm:$0xff] %v187
  %343 = vst [vmem:[%s3 + $0x48] sm:$0xff] %v189
  %344 = vst [vmem:[%s3 + $0x50] sm:$0xff] %v300
  %345 = vst [vmem:[%s3 + $0x58] sm:$0xff] %v302
  %346 = vst [vmem:[%s3 + $0x60] sm:$0xff] %v193
  %347 = vst [vmem:[%s3 + $0x68] sm:$0xff] %v195
  %348 = vst [vmem:[%s3 + $0x70] sm:$0xff] %v306
  %349 = vst [vmem:[%s3 + $0x78] sm:$0xff] %v308
  %350 = vst [vmem:[%s3 + $0x80] sm:$0xff] %v199
  %351 = vst [vmem:[%s3 + $0x88] sm:$0xff] %v201
  %352 = vst [vmem:[%s3 + $0x90] sm:$0xff] %v312
  %353 = vst [vmem:[%s3 + $0x98] sm:$0xff] %v314
  %354 = vst [vmem:[%s3 + $0xa0] sm:$0xff] %v205
  %355 = vst [vmem:[%s3 + $0xa8] sm:$0xff] %v207
  %356 = vst [vmem:[%s3 + $0xb0] sm:$0xff] %v318
  %357 = vst [vmem:[%s3 + $0xb8] sm:$0xff] %v320
  %358 = vst [vmem:[%s3 + $0xc0] sm:$0xff] %v211
  %359 = vst [vmem:[%s3 + $0xc8] sm:$0xff] %v213
  %360 = vst [vmem:[%s3 + $0xd0] sm:$0xff] %v324
  %361 = vst [vmem:[%s3 + $0xd8] sm:$0xff] %v326
  %362 = vst [vmem:[%s3 + $0xe0] sm:$0xff] %v217
  %363 = vst [vmem:[%s3 + $0xe8] sm:$0xff] %v219
  %364 = vst [vmem:[%s3 + $0xf0] sm:$0xff] %v330
  %365 = vst [vmem:[%s3 + $0xf8] sm:$0xff] %v332
  // Predicated region
  $region14: #{batch_rnn_forward.4} parent=0 // pred_check
    _
  $region15: #{batch_rnn_forward.4} parent=0 // pred_check_branch
    %367 = sbr.rel (0) target = $region17
  $region16: #{batch_rnn_forward.4} parent=0 // pred_region
    _
  $region17: #{batch_rnn_forward.4} parent=0 // pred_fallthru
    _
  // Predicated region
  $region18: #{batch_rnn_forward.4} parent=0 // pred_check
    _
  $region19: #{batch_rnn_forward.4} parent=0 // pred_check_branch
    %369 = sbr.rel (0) target = $region21
  $region20: #{batch_rnn_forward.4} parent=0 // pred_region
    _
  $region21: #{batch_rnn_forward.4} parent=0 // pred_fallthru
    _

// kernel: batch_rnn_forward.5
$region0: #{batch_rnn_forward.5}
  #allocation0 [shape = 'u32[]', space=smem, size = 0x4, offset = 0x4, fixed_abs, tag = 'smem constant byte address 0x4 - core index']
  #allocation1 [shape = 'u32[144,128]{1,0:T(1,128)}', space=vmem, size = 0x12000, scoped, tag = 'internal scratch']
  #allocation2 [shape = 'f32[8,128]{1,0:T(8,128)}', space=vmem, size = 0x1000, scoped, tag = 'scratch operand']
  #allocation3 [shape = 'f32[8,128]{1,0:T(8,128)}', space=vmem, size = 0x1000, scoped, tag = 'scratch operand']
  %s0 = inlined_call_operand.vmem [shape: f32[8,8,512], index: 0, kind: input, shape index: {}]
  %s1 = inlined_call_operand.vmem [shape: f32[128,512], index: 1, kind: input, shape index: {}]
  %s2 = inlined_call_operand.vmem [shape: f32[8,8,128], index: 2, kind: output, shape index: {}]
  %s3 = sld [smem:[#allocation0]]
  $region22: #{batch_rnn_forward.5} parent=0
    _
  %s5 = ssub.s32 1, %s3
  %s6 = scalar_select 0, %s5, %s3
  // Predicated region
  $region2: #{batch_rnn_forward.5} parent=0 // pred_check
    _
  $region3: #{batch_rnn_forward.5} parent=0 // pred_check_branch
    %8 = sbr.rel (0) target = $region5
  $region4: #{batch_rnn_forward.5} parent=0 // pred_region
    _
  $region5: #{batch_rnn_forward.5} parent=0 // pred_fallthru
    _
  // Predicated region
  $region6: #{batch_rnn_forward.5} parent=0 // pred_check
    _
  $region7: #{batch_rnn_forward.5} parent=0 // pred_check_branch
    %10 = sbr.rel (0) target = $region9
  $region8: #{batch_rnn_forward.5} parent=0 // pred_region
    _
  $region9: #{batch_rnn_forward.5} parent=0 // pred_fallthru
    _
  %p11 = scmp.eq.s32.totalorder 0, 0
  // Predicated region
  $region10: #{batch_rnn_forward.5} parent=0 // pred_check
    %p12 = pneg %p11
  $region11: #{batch_rnn_forward.5} parent=0 // pred_check_branch
    %14 = sbr.rel (%p12) target = $region13
  $region12: #{batch_rnn_forward.5} parent=0 // pred_region
    %15 = vst [vmem:[#allocation2] sm:$0xff] 0.0
    %16 = vst [vmem:[#allocation3] sm:$0xff] 0.0
  $region13: #{batch_rnn_forward.5} parent=0 // pred_fallthru
    _
  %v17 = vld [vmem:[%s1] sm:$0xff]
  %v18 = vld [vmem:[%s1 + $0x8] sm:$0xff]
  %v19 = vld [vmem:[%s1 + $0x10] sm:$0xff]
  %v20 = vld [vmem:[%s1 + $0x18] sm:$0xff]
  %v21 = vld [vmem:[%s1 + $0x20] sm:$0xff]
  %v22 = vld [vmem:[%s1 + $0x28] sm:$0xff]
  %v23 = vld [vmem:[%s1 + $0x30] sm:$0xff]
  %v24 = vld [vmem:[%s1 + $0x38] sm:$0xff]
  %v25 = vld [vmem:[%s1 + $0x40] sm:$0xff]
  %v26 = vld [vmem:[%s1 + $0x48] sm:$0xff]
  %v27 = vld [vmem:[%s1 + $0x50] sm:$0xff]
  %v28 = vld [vmem:[%s1 + $0x58] sm:$0xff]
  %v29 = vld [vmem:[%s1 + $0x60] sm:$0xff]
  %v30 = vld [vmem:[%s1 + $0x68] sm:$0xff]
  %v31 = vld [vmem:[%s1 + $0x70] sm:$0xff]
  %v32 = vld [vmem:[%s1 + $0x78] sm:$0xff]
  %v33 = vld [vmem:[%s1 + $0x80] sm:$0xff]
  %v34 = vld [vmem:[%s1 + $0x88] sm:$0xff]
  %v35 = vld [vmem:[%s1 + $0x90] sm:$0xff]
  %v36 = vld [vmem:[%s1 + $0x98] sm:$0xff]
  %v37 = vld [vmem:[%s1 + $0xa0] sm:$0xff]
  %v38 = vld [vmem:[%s1 + $0xa8] sm:$0xff]
  %v39 = vld [vmem:[%s1 + $0xb0] sm:$0xff]
  %v40 = vld [vmem:[%s1 + $0xb8] sm:$0xff]
  %v41 = vld [vmem:[%s1 + $0xc0] sm:$0xff]
  %v42 = vld [vmem:[%s1 + $0xc8] sm:$0xff]
  %v43 = vld [vmem:[%s1 + $0xd0] sm:$0xff]
  %v44 = vld [vmem:[%s1 + $0xd8] sm:$0xff]
  %v45 = vld [vmem:[%s1 + $0xe0] sm:$0xff]
  %v46 = vld [vmem:[%s1 + $0xe8] sm:$0xff]
  %v47 = vld [vmem:[%s1 + $0xf0] sm:$0xff]
  %v48 = vld [vmem:[%s1 + $0xf8] sm:$0xff]
  %v49 = vld [vmem:[%s1 + $0x100] sm:$0xff]
  %v50 = vld [vmem:[%s1 + $0x108] sm:$0xff]
  %v51 = vld [vmem:[%s1 + $0x110] sm:$0xff]
  %v52 = vld [vmem:[%s1 + $0x118] sm:$0xff]
  %v53 = vld [vmem:[%s1 + $0x120] sm:$0xff]
  %v54 = vld [vmem:[%s1 + $0x128] sm:$0xff]
  %v55 = vld [vmem:[%s1 + $0x130] sm:$0xff]
  %v56 = vld [vmem:[%s1 + $0x138] sm:$0xff]
  %v57 = vld [vmem:[%s1 + $0x140] sm:$0xff]
  %v58 = vld [vmem:[%s1 + $0x148] sm:$0xff]
  %v59 = vld [vmem:[%s1 + $0x150] sm:$0xff]
  %v60 = vld [vmem:[%s1 + $0x158] sm:$0xff]
  %v61 = vld [vmem:[%s1 + $0x160] sm:$0xff]
  %v62 = vld [vmem:[%s1 + $0x168] sm:$0xff]
  %v63 = vld [vmem:[%s1 + $0x170] sm:$0xff]
  %v64 = vld [vmem:[%s1 + $0x178] sm:$0xff]
  %v65 = vld [vmem:[%s1 + $0x180] sm:$0xff]
  %v66 = vld [vmem:[%s1 + $0x188] sm:$0xff]
  %v67 = vld [vmem:[%s1 + $0x190] sm:$0xff]
  %v68 = vld [vmem:[%s1 + $0x198] sm:$0xff]
  %v69 = vld [vmem:[%s1 + $0x1a0] sm:$0xff]
  %v70 = vld [vmem:[%s1 + $0x1a8] sm:$0xff]
  %v71 = vld [vmem:[%s1 + $0x1b0] sm:$0xff]
  %v72 = vld [vmem:[%s1 + $0x1b8] sm:$0xff]
  %v73 = vld [vmem:[%s1 + $0x1c0] sm:$0xff]
  %v74 = vld [vmem:[%s1 + $0x1c8] sm:$0xff]
  %v75 = vld [vmem:[%s1 + $0x1d0] sm:$0xff]
  %v76 = vld [vmem:[%s1 + $0x1d8] sm:$0xff]
  %v77 = vld [vmem:[%s1 + $0x1e0] sm:$0xff]
  %v78 = vld [vmem:[%s1 + $0x1e8] sm:$0xff]
  %v79 = vld [vmem:[%s1 + $0x1f0] sm:$0xff]
  %v80 = vld [vmem:[%s1 + $0x1f8] sm:$0xff]
  %v81 = vld [vmem:[#allocation2] sm:$0xff]
  %v82 = vld [vmem:[#allocation3] sm:$0xff]
  %v83 = vld [vmem:[%s0] sm:$0xff]
  %v84 = vld [vmem:[%s0 + $0x8] sm:$0xff]
  %v85 = vld [vmem:[%s0 + $0x10] sm:$0xff]
  %v86 = vld [vmem:[%s0 + $0x18] sm:$0xff]
  %87 = vmatprep.subr.mxu0 %v78
  %88 = vmatpush1.msra.mxu0 %v77
  %89 = vmatprep.subr.mxu0 %v74
  %90 = vmatpush1.msra.mxu0 %v73
  %91 = vmatprep.subr.mxu0 %v70
  %92 = vmatpush1.msra.mxu0 %v69
  %93 = vmatprep.subr.mxu0 %v66
  %94 = vmatpush1.msra.mxu0 %v65
  %95 = vmatprep.subr.mxu0 %v62
  %96 = vmatpush1.msra.mxu0 %v61
  %97 = vmatprep.subr.mxu0 %v58
  %98 = vmatpush1.msra.mxu0 %v57
  %99 = vmatprep.subr.mxu0 %v54
  %100 = vmatpush1.msra.mxu0 %v53
  %101 = vmatprep.subr.mxu0 %v50
  %102 = vmatpush1.msra.mxu0 %v49
  %103 = vmatprep.subr.mxu0 %v46
  %104 = vmatpush1.msra.mxu0 %v45
  %105 = vmatprep.subr.mxu0 %v42
  %106 = vmatpush1.msra.mxu0 %v41
  %107 = vmatprep.subr.mxu0 %v38
  %108 = vmatpush1.msra.mxu0 %v37
  %109 = vmatprep.subr.mxu0 %v34
  %110 = vmatpush1.msra.mxu0 %v33
  %111 = vmatprep.subr.mxu0 %v30
  %112 = vmatpush1.msra.mxu0 %v29
  %113 = vmatprep.subr.mxu0 %v26
  %114 = vmatpush1.msra.mxu0 %v25
  %115 = vmatprep.subr.mxu0 %v22
  %116 = vmatpush1.msra.mxu0 %v21
  %117 = vmatprep.subr.mxu0 %v18
  %118 = vmatpush1.msra.mxu0 %v17
  %119 = vmatprep.subr.mxu0 0.0
  %120 = vmatpush2.msra.mxu0 0.0
  %121 = vmatprep.subr.mxu0 0.0
  %122 = vmatpush2.msra.mxu0 0.0
  %123 = vmatprep.subr.mxu0 0.0
  %124 = vmatpush2.msra.mxu0 0.0
  %125 = vmatprep.subr.mxu0 0.0
  %126 = vmatpush2.msra.mxu0 0.0
  %127 = vmatprep.subr.mxu0 0.0
  %128 = vmatpush2.msra.mxu0 0.0
  %129 = vmatprep.subr.mxu0 0.0
  %130 = vmatpush2.msra.mxu0 0.0
  %131 = vmatprep.subr.mxu0 0.0
  %132 = vmatpush2.msra.mxu0 0.0
  %133 = vmatprep.subr.mxu0 0.0
  %134 = vmatpush2.msra.mxu0 0.0
  %135 = vmatprep.subr.mxu0 0.0
  %136 = vmatpush2.msra.mxu0 0.0
  %137 = vmatprep.subr.mxu0 0.0
  %138 = vmatpush2.msra.mxu0 0.0
  %139 = vmatprep.subr.mxu0 0.0
  %140 = vmatpush2.msra.mxu0 0.0
  %141 = vmatprep.subr.mxu0 0.0
  %142 = vmatpush2.msra.mxu0 0.0
  %143 = vmatprep.subr.mxu0 0.0
  %144 = vmatpush2.msra.mxu0 0.0
  %145 = vmatprep.subr.mxu0 0.0
  %146 = vmatpush2.msra.mxu0 0.0
  %147 = vmatprep.subr.mxu0 0.0
  %148 = vmatpush2.msra.mxu0 0.0
  %149 = vmatprep.subr.mxu0 0.0
  %150 = vmatpush2.msra.mxu0 0.0
  %151 = vmatprep.mubr.f32.mxu0 0.0
  %152 = vmatmul.mubr.f32.gmra.mxu0 %v81
  %v153 = vpop.f32.mrf.mxu0
  %v154 = vadd.f32 0.0, %v153
  %v155 = vpop.f32.mrf.mxu0
  %v156 = vadd.f32 0.0, %v155
  %157 = vdwg.mxu0
  %158 = vmatprep.subr.mxu0 %v80
  %159 = vmatpush1.msra.mxu0 %v79
  %160 = vmatprep.subr.mxu0 %v76
  %161 = vmatpush1.msra.mxu0 %v75
  %162 = vmatprep.subr.mxu0 %v72
  %163 = vmatpush1.msra.mxu0 %v71
  %164 = vmatprep.subr.mxu0 %v68
  %165 = vmatpush1.msra.mxu0 %v67
  %166 = vmatprep.subr.mxu0 %v64
  %167 = vmatpush1.msra.mxu0 %v63
  %168 = vmatprep.subr.mxu0 %v60
  %169 = vmatpush1.msra.mxu0 %v59
  %170 = vmatprep.subr.mxu0 %v56
  %171 = vmatpush1.msra.mxu0 %v55
  %172 = vmatprep.subr.mxu0 %v52
  %173 = vmatpush1.msra.mxu0 %v51
  %174 = vmatprep.subr.mxu0 %v48
  %175 = vmatpush1.msra.mxu0 %v47
  %176 = vmatprep.subr.mxu0 %v44
  %177 = vmatpush1.msra.mxu0 %v43
  %178 = vmatprep.subr.mxu0 %v40
  %179 = vmatpush1.msra.mxu0 %v39
  %180 = vmatprep.subr.mxu0 %v36
  %181 = vmatpush1.msra.mxu0 %v35
  %182 = vmatprep.subr.mxu0 %v32
  %183 = vmatpush1.msra.mxu0 %v31
  %184 = vmatprep.subr.mxu0 %v28
  %185 = vmatpush1.msra.mxu0 %v27
  %186 = vmatprep.subr.mxu0 %v24
  %187 = vmatpush1.msra.mxu0 %v23
  %188 = vmatprep.subr.mxu0 %v20
  %189 = vmatpush1.msra.mxu0 %v19
  %190 = vmatprep.subr.mxu0 0.0
  %191 = vmatpush2.msra.mxu0 0.0
  %192 = vmatprep.subr.mxu0 0.0
  %193 = vmatpush2.msra.mxu0 0.0
  %194 = vmatprep.subr.mxu0 0.0
  %195 = vmatpush2.msra.mxu0 0.0
  %196 = vmatprep.subr.mxu0 0.0
  %197 = vmatpush2.msra.mxu0 0.0
  %198 = vmatprep.subr.mxu0 0.0
  %199 = vmatpush2.msra.mxu0 0.0
  %200 = vmatprep.subr.mxu0 0.0
  %201 = vmatpush2.msra.mxu0 0.0
  %202 = vmatprep.subr.mxu0 0.0
  %203 = vmatpush2.msra.mxu0 0.0
  %204 = vmatprep.subr.mxu0 0.0
  %205 = vmatpush2.msra.mxu0 0.0
  %206 = vmatprep.subr.mxu0 0.0
  %207 = vmatpush2.msra.mxu0 0.0
  %208 = vmatprep.subr.mxu0 0.0
  %209 = vmatpush2.msra.mxu0 0.0
  %210 = vmatprep.subr.mxu0 0.0
  %211 = vmatpush2.msra.mxu0 0.0
  %212 = vmatprep.subr.mxu0 0.0
  %213 = vmatpush2.msra.mxu0 0.0
  %214 = vmatprep.subr.mxu0 0.0
  %215 = vmatpush2.msra.mxu0 0.0
  %216 = vmatprep.subr.mxu0 0.0
  %217 = vmatpush2.msra.mxu0 0.0
  %218 = vmatprep.subr.mxu0 0.0
  %219 = vmatpush2.msra.mxu0 0.0
  %220 = vmatprep.subr.mxu0 0.0
  %221 = vmatpush2.msra.mxu0 0.0
  %222 = vmatprep.mubr.f32.mxu0 0.0
  %223 = vmatmul.mubr.f32.gmra.mxu0 %v81
  %v224 = vpop.f32.mrf.mxu0
  %v225 = vadd.f32 0.0, %v224
  %v226 = vpop.f32.mrf.mxu0
  %v227 = vadd.f32 0.0, %v226
  %228 = vdwg.mxu0
  %v229 = vadd.f32 %v83, %v154
  %v230 = vadd.f32 %v84, %v156
  %v231 = vadd.f32 %v85, %v225
  %v232 = vadd.f32 %v86, %v227
  %v233 = vmul.f32 %v229, 0.5
  %v234 = vmul.f32 %v230, 0.5
  %v235 = vmul.f32 %v231, 0.5
  %v236 = vtanh.pop %v233
  %v237 = vtanh.pop %v234
  %v238 = vtanh.pop %v235
  %v239 = vadd.f32 %v236, 1.0
  %v240 = vadd.f32 %v237, 1.0
  %v241 = vadd.f32 %v238, 1.0
  %v242 = vmul.f32 %v239, 0.5
  %v243 = vmul.f32 %v240, 0.5
  %v244 = vmul.f32 %v241, 0.5
  %v245 = vtanh.pop %v232
  %v246 = vmul.f32 %v243, %v82
  %v247 = vmul.f32 %v242, %v245
  %v248 = vadd.f32 %v246, %v247
  %v249 = vtanh.pop %v248
  %v250 = vmul.f32 %v244, %v249
  %251 = vst [vmem:[%s2] sm:$0xff] %v250
  %s252 = scalar_lea.vmem %s0, 32
  %v253 = vld [vmem:[%s252] sm:$0xff]
  %v254 = vld [vmem:[%s252 + $0x8] sm:$0xff]
  %v255 = vld [vmem:[%s252 + $0x10] sm:$0xff]
  %v256 = vld [vmem:[%s252 + $0x18] sm:$0xff]
  %257 = vmatprep.subr.mxu0 %v78
  %258 = vmatpush1.msra.mxu0 %v77
  %259 = vmatprep.subr.mxu0 %v74
  %260 = vmatpush1.msra.mxu0 %v73
  %261 = vmatprep.subr.mxu0 %v70
  %262 = vmatpush1.msra.mxu0 %v69
  %263 = vmatprep.subr.mxu0 %v66
  %264 = vmatpush1.msra.mxu0 %v65
  %265 = vmatprep.subr.mxu0 %v62
  %266 = vmatpush1.msra.mxu0 %v61
  %267 = vmatprep.subr.mxu0 %v58
  %268 = vmatpush1.msra.mxu0 %v57
  %269 = vmatprep.subr.mxu0 %v54
  %270 = vmatpush1.msra.mxu0 %v53
  %271 = vmatprep.subr.mxu0 %v50
  %272 = vmatpush1.msra.mxu0 %v49
  %273 = vmatprep.subr.mxu0 %v46
  %274 = vmatpush1.msra.mxu0 %v45
  %275 = vmatprep.subr.mxu0 %v42
  %276 = vmatpush1.msra.mxu0 %v41
  %277 = vmatprep.subr.mxu0 %v38
  %278 = vmatpush1.msra.mxu0 %v37
  %279 = vmatprep.subr.mxu0 %v34
  %280 = vmatpush1.msra.mxu0 %v33
  %281 = vmatprep.subr.mxu0 %v30
  %282 = vmatpush1.msra.mxu0 %v29
  %283 = vmatprep.subr.mxu0 %v26
  %284 = vmatpush1.msra.mxu0 %v25
  %285 = vmatprep.subr.mxu0 %v22
  %286 = vmatpush1.msra.mxu0 %v21
  %287 = vmatprep.subr.mxu0 %v18
  %288 = vmatpush1.msra.mxu0 %v17
  %289 = vmatprep.subr.mxu0 0.0
  %290 = vmatpush2.msra.mxu0 0.0
  %291 = vmatprep.subr.mxu0 0.0
  %292 = vmatpush2.msra.mxu0 0.0
  %293 = vmatprep.subr.mxu0 0.0
  %294 = vmatpush2.msra.mxu0 0.0
  %295 = vmatprep.subr.mxu0 0.0
  %296 = vmatpush2.msra.mxu0 0.0
  %297 = vmatprep.subr.mxu0 0.0
  %298 = vmatpush2.msra.mxu0 0.0
  %299 = vmatprep.subr.mxu0 0.0
  %300 = vmatpush2.msra.mxu0 0.0
  %301 = vmatprep.subr.mxu0 0.0
  %302 = vmatpush2.msra.mxu0 0.0
  %303 = vmatprep.subr.mxu0 0.0
  %304 = vmatpush2.msra.mxu0 0.0
  %305 = vmatprep.subr.mxu0 0.0
  %306 = vmatpush2.msra.mxu0 0.0
  %307 = vmatprep.subr.mxu0 0.0
  %308 = vmatpush2.msra.mxu0 0.0
  %309 = vmatprep.subr.mxu0 0.0
  %310 = vmatpush2.msra.mxu0 0.0
  %311 = vmatprep.subr.mxu0 0.0
  %312 = vmatpush2.msra.mxu0 0.0
  %313 = vmatprep.subr.mxu0 0.0
  %314 = vmatpush2.msra.mxu0 0.0
  %315 = vmatprep.subr.mxu0 0.0
  %316 = vmatpush2.msra.mxu0 0.0
  %317 = vmatprep.subr.mxu0 0.0
  %318 = vmatpush2.msra.mxu0 0.0
  %319 = vmatprep.subr.mxu0 0.0
  %320 = vmatpush2.msra.mxu0 0.0
  %321 = vmatprep.mubr.f32.mxu0 0.0
  %322 = vmatmul.mubr.f32.gmra.mxu0 %v250
  %v323 = vpop.f32.mrf.mxu0
  %v324 = vadd.f32 0.0, %v323
  %v325 = vpop.f32.mrf.mxu0
  %v326 = vadd.f32 0.0, %v325
  %327 = vdwg.mxu0
  %328 = vmatprep.subr.mxu0 %v80
  %329 = vmatpush1.msra.mxu0 %v79
  %330 = vmatprep.subr.mxu0 %v76
  %331 = vmatpush1.msra.mxu0 %v75
  %332 = vmatprep.subr.mxu0 %v72
  %333 = vmatpush1.msra.mxu0 %v71
  %334 = vmatprep.subr.mxu0 %v68
  %335 = vmatpush1.msra.mxu0 %v67
  %336 = vmatprep.subr.mxu0 %v64
  %337 = vmatpush1.msra.mxu0 %v63
  %338 = vmatprep.subr.mxu0 %v60
  %339 = vmatpush1.msra.mxu0 %v59
  %340 = vmatprep.subr.mxu0 %v56
  %341 = vmatpush1.msra.mxu0 %v55
  %342 = vmatprep.subr.mxu0 %v52
  %343 = vmatpush1.msra.mxu0 %v51
  %344 = vmatprep.subr.mxu0 %v48
  %345 = vmatpush1.msra.mxu0 %v47
  %346 = vmatprep.subr.mxu0 %v44
  %347 = vmatpush1.msra.mxu0 %v43
  %348 = vmatprep.subr.mxu0 %v40
  %349 = vmatpush1.msra.mxu0 %v39
  %350 = vmatprep.subr.mxu0 %v36
  %351 = vmatpush1.msra.mxu0 %v35
  %352 = vmatprep.subr.mxu0 %v32
  %353 = vmatpush1.msra.mxu0 %v31
  %354 = vmatprep.subr.mxu0 %v28
  %355 = vmatpush1.msra.mxu0 %v27
  %356 = vmatprep.subr.mxu0 %v24
  %357 = vmatpush1.msra.mxu0 %v23
  %358 = vmatprep.subr.mxu0 %v20
  %359 = vmatpush1.msra.mxu0 %v19
  %360 = vmatprep.subr.mxu0 0.0
  %361 = vmatpush2.msra.mxu0 0.0
  %362 = vmatprep.subr.mxu0 0.0
  %363 = vmatpush2.msra.mxu0 0.0
  %364 = vmatprep.subr.mxu0 0.0
  %365 = vmatpush2.msra.mxu0 0.0
  %366 = vmatprep.subr.mxu0 0.0
  %367 = vmatpush2.msra.mxu0 0.0
  %368 = vmatprep.subr.mxu0 0.0
  %369 = vmatpush2.msra.mxu0 0.0
  %370 = vmatprep.subr.mxu0 0.0
  %371 = vmatpush2.msra.mxu0 0.0
  %372 = vmatprep.subr.mxu0 0.0
  %373 = vmatpush2.msra.mxu0 0.0
  %374 = vmatprep.subr.mxu0 0.0
  %375 = vmatpush2.msra.mxu0 0.0
  %376 = vmatprep.subr.mxu0 0.0
  %377 = vmatpush2.msra.mxu0 0.0
  %378 = vmatprep.subr.mxu0 0.0
  %379 = vmatpush2.msra.mxu0 0.0
  %380 = vmatprep.subr.mxu0 0.0
  %381 = vmatpush2.msra.mxu0 0.0
  %382 = vmatprep.subr.mxu0 0.0
  %383 = vmatpush2.msra.mxu0 0.0
  %384 = vmatprep.subr.mxu0 0.0
  %385 = vmatpush2.msra.mxu0 0.0
  %386 = vmatprep.subr.mxu0 0.0
  %387 = vmatpush2.msra.mxu0 0.0
  %388 = vmatprep.subr.mxu0 0.0
  %389 = vmatpush2.msra.mxu0 0.0
  %390 = vmatprep.subr.mxu0 0.0
  %391 = vmatpush2.msra.mxu0 0.0
  %392 = vmatprep.mubr.f32.mxu0 0.0
  %393 = vmatmul.mubr.f32.gmra.mxu0 %v250
  %v394 = vpop.f32.mrf.mxu0
  %v395 = vadd.f32 0.0, %v394
  %v396 = vpop.f32.mrf.mxu0
  %v397 = vadd.f32 0.0, %v396
  %398 = vdwg.mxu0
  %v399 = vadd.f32 %v253, %v324
  %v400 = vadd.f32 %v254, %v326
  %v401 = vadd.f32 %v255, %v395
  %v402 = vadd.f32 %v256, %v397
  %v403 = vmul.f32 %v399, 0.5
  %v404 = vmul.f32 %v400, 0.5
  %v405 = vmul.f32 %v401, 0.5
  %v406 = vtanh.pop %v403
  %v407 = vtanh.pop %v404
  %v408 = vtanh.pop %v405
  %v409 = vadd.f32 %v406, 1.0
  %v410 = vadd.f32 %v407, 1.0
  %v411 = vadd.f32 %v408, 1.0
  %v412 = vmul.f32 %v409, 0.5
  %v413 = vmul.f32 %v410, 0.5
  %v414 = vmul.f32 %v411, 0.5
  %v415 = vtanh.pop %v402
  %v416 = vmul.f32 %v413, %v248
  %v417 = vmul.f32 %v412, %v415
  %v418 = vadd.f32 %v416, %v417
  %v419 = vtanh.pop %v418
  %v420 = vmul.f32 %v414, %v419
  %s421 = scalar_lea.vmem %s2, 8
  %422 = vst [vmem:[%s421] sm:$0xff] %v420
  %s423 = scalar_lea.vmem %s0, 64
  %v424 = vld [vmem:[%s423] sm:$0xff]
  %v425 = vld [vmem:[%s423 + $0x8] sm:$0xff]
  %v426 = vld [vmem:[%s423 + $0x10] sm:$0xff]
  %v427 = vld [vmem:[%s423 + $0x18] sm:$0xff]
  %428 = vmatprep.subr.mxu0 %v78
  %429 = vmatpush1.msra.mxu0 %v77
  %430 = vmatprep.subr.mxu0 %v74
  %431 = vmatpush1.msra.mxu0 %v73
  %432 = vmatprep.subr.mxu0 %v70
  %433 = vmatpush1.msra.mxu0 %v69
  %434 = vmatprep.subr.mxu0 %v66
  %435 = vmatpush1.msra.mxu0 %v65
  %436 = vmatprep.subr.mxu0 %v62
  %437 = vmatpush1.msra.mxu0 %v61
  %438 = vmatprep.subr.mxu0 %v58
  %439 = vmatpush1.msra.mxu0 %v57
  %440 = vmatprep.subr.mxu0 %v54
  %441 = vmatpush1.msra.mxu0 %v53
  %442 = vmatprep.subr.mxu0 %v50
  %443 = vmatpush1.msra.mxu0 %v49
  %444 = vmatprep.subr.mxu0 %v46
  %445 = vmatpush1.msra.mxu0 %v45
  %446 = vmatprep.subr.mxu0 %v42
  %447 = vmatpush1.msra.mxu0 %v41
  %448 = vmatprep.subr.mxu0 %v38
  %449 = vmatpush1.msra.mxu0 %v37
  %450 = vmatprep.subr.mxu0 %v34
  %451 = vmatpush1.msra.mxu0 %v33
  %452 = vmatprep.subr.mxu0 %v30
  %453 = vmatpush1.msra.mxu0 %v29
  %454 = vmatprep.subr.mxu0 %v26
  %455 = vmatpush1.msra.mxu0 %v25
  %456 = vmatprep.subr.mxu0 %v22
  %457 = vmatpush1.msra.mxu0 %v21
  %458 = vmatprep.subr.mxu0 %v18
  %459 = vmatpush1.msra.mxu0 %v17
  %460 = vmatprep.subr.mxu0 0.0
  %461 = vmatpush2.msra.mxu0 0.0
  %462 = vmatprep.subr.mxu0 0.0
  %463 = vmatpush2.msra.mxu0 0.0
  %464 = vmatprep.subr.mxu0 0.0
  %465 = vmatpush2.msra.mxu0 0.0
  %466 = vmatprep.subr.mxu0 0.0
  %467 = vmatpush2.msra.mxu0 0.0
  %468 = vmatprep.subr.mxu0 0.0
  %469 = vmatpush2.msra.mxu0 0.0
  %470 = vmatprep.subr.mxu0 0.0
  %471 = vmatpush2.msra.mxu0 0.0
  %472 = vmatprep.subr.mxu0 0.0
  %473 = vmatpush2.msra.mxu0 0.0
  %474 = vmatprep.subr.mxu0 0.0
  %475 = vmatpush2.msra.mxu0 0.0
  %476 = vmatprep.subr.mxu0 0.0
  %477 = vmatpush2.msra.mxu0 0.0
  %478 = vmatprep.subr.mxu0 0.0
  %479 = vmatpush2.msra.mxu0 0.0
  %480 = vmatprep.subr.mxu0 0.0
  %481 = vmatpush2.msra.mxu0 0.0
  %482 = vmatprep.subr.mxu0 0.0
  %483 = vmatpush2.msra.mxu0 0.0
  %484 = vmatprep.subr.mxu0 0.0
  %485 = vmatpush2.msra.mxu0 0.0
  %486 = vmatprep.subr.mxu0 0.0
  %487 = vmatpush2.msra.mxu0 0.0
  %488 = vmatprep.subr.mxu0 0.0
  %489 = vmatpush2.msra.mxu0 0.0
  %490 = vmatprep.subr.mxu0 0.0
  %491 = vmatpush2.msra.mxu0 0.0
  %492 = vmatprep.mubr.f32.mxu0 0.0
  %493 = vmatmul.mubr.f32.gmra.mxu0 %v420
  %v494 = vpop.f32.mrf.mxu0
  %v495 = vadd.f32 0.0, %v494
  %v496 = vpop.f32.mrf.mxu0
  %v497 = vadd.f32 0.0, %v496
  %498 = vdwg.mxu0
  %499 = vmatprep.subr.mxu0 %v80
  %500 = vmatpush1.msra.mxu0 %v79
  %501 = vmatprep.subr.mxu0 %v76
  %502 = vmatpush1.msra.mxu0 %v75
  %503 = vmatprep.subr.mxu0 %v72
  %504 = vmatpush1.msra.mxu0 %v71
  %505 = vmatprep.subr.mxu0 %v68
  %506 = vmatpush1.msra.mxu0 %v67
  %507 = vmatprep.subr.mxu0 %v64
  %508 = vmatpush1.msra.mxu0 %v63
  %509 = vmatprep.subr.mxu0 %v60
  %510 = vmatpush1.msra.mxu0 %v59
  %511 = vmatprep.subr.mxu0 %v56
  %512 = vmatpush1.msra.mxu0 %v55
  %513 = vmatprep.subr.mxu0 %v52
  %514 = vmatpush1.msra.mxu0 %v51
  %515 = vmatprep.subr.mxu0 %v48
  %516 = vmatpush1.msra.mxu0 %v47
  %517 = vmatprep.subr.mxu0 %v44
  %518 = vmatpush1.msra.mxu0 %v43
  %519 = vmatprep.subr.mxu0 %v40
  %520 = vmatpush1.msra.mxu0 %v39
  %521 = vmatprep.subr.mxu0 %v36
  %522 = vmatpush1.msra.mxu0 %v35
  %523 = vmatprep.subr.mxu0 %v32
  %524 = vmatpush1.msra.mxu0 %v31
  %525 = vmatprep.subr.mxu0 %v28
  %526 = vmatpush1.msra.mxu0 %v27
  %527 = vmatprep.subr.mxu0 %v24
  %528 = vmatpush1.msra.mxu0 %v23
  %529 = vmatprep.subr.mxu0 %v20
  %530 = vmatpush1.msra.mxu0 %v19
  %531 = vmatprep.subr.mxu0 0.0
  %532 = vmatpush2.msra.mxu0 0.0
  %533 = vmatprep.subr.mxu0 0.0
  %534 = vmatpush2.msra.mxu0 0.0
  %535 = vmatprep.subr.mxu0 0.0
  %536 = vmatpush2.msra.mxu0 0.0
  %537 = vmatprep.subr.mxu0 0.0
  %538 = vmatpush2.msra.mxu0 0.0
  %539 = vmatprep.subr.mxu0 0.0
  %540 = vmatpush2.msra.mxu0 0.0
  %541 = vmatprep.subr.mxu0 0.0
  %542 = vmatpush2.msra.mxu0 0.0
  %543 = vmatprep.subr.mxu0 0.0
  %544 = vmatpush2.msra.mxu0 0.0
  %545 = vmatprep.subr.mxu0 0.0
  %546 = vmatpush2.msra.mxu0 0.0
  %547 = vmatprep.subr.mxu0 0.0
  %548 = vmatpush2.msra.mxu0 0.0
  %549 = vmatprep.subr.mxu0 0.0
  %550 = vmatpush2.msra.mxu0 0.0
  %551 = vmatprep.subr.mxu0 0.0
  %552 = vmatpush2.msra.mxu0 0.0
  %553 = vmatprep.subr.mxu0 0.0
  %554 = vmatpush2.msra.mxu0 0.0
  %555 = vmatprep.subr.mxu0 0.0
  %556 = vmatpush2.msra.mxu0 0.0
  %557 = vmatprep.subr.mxu0 0.0
  %558 = vmatpush2.msra.mxu0 0.0
  %559 = vmatprep.subr.mxu0 0.0
  %560 = vmatpush2.msra.mxu0 0.0
  %561 = vmatprep.subr.mxu0 0.0
  %562 = vmatpush2.msra.mxu0 0.0
  %563 = vmatprep.mubr.f32.mxu0 0.0
  %564 = vmatmul.mubr.f32.gmra.mxu0 %v420
  %v565 = vpop.f32.mrf.mxu0
  %v566 = vadd.f32 0.0, %v565
  %v567 = vpop.f32.mrf.mxu0
  %v568 = vadd.f32 0.0, %v567
  %569 = vdwg.mxu0
  %v570 = vadd.f32 %v424, %v495
  %v571 = vadd.f32 %v425, %v497
  %v572 = vadd.f32 %v426, %v566
  %v573 = vadd.f32 %v427, %v568
  %v574 = vmul.f32 %v570, 0.5
  %v575 = vmul.f32 %v571, 0.5
  %v576 = vmul.f32 %v572, 0.5
  %v577 = vtanh.pop %v574
  %v578 = vtanh.pop %v575
  %v579 = vtanh.pop %v576
  %v580 = vadd.f32 %v577, 1.0
  %v581 = vadd.f32 %v578, 1.0
  %v582 = vadd.f32 %v579, 1.0
  %v583 = vmul.f32 %v580, 0.5
  %v584 = vmul.f32 %v581, 0.5
  %v585 = vmul.f32 %v582, 0.5
  %v586 = vtanh.pop %v573
  %v587 = vmul.f32 %v584, %v418
  %v588 = vmul.f32 %v583, %v586
  %v589 = vadd.f32 %v587, %v588
  %v590 = vtanh.pop %v589
  %v591 = vmul.f32 %v585, %v590
  %s592 = scalar_lea.vmem %s2, 16
  %593 = vst [vmem:[%s592] sm:$0xff] %v591
  %s594 = scalar_lea.vmem %s0, 96
  %v595 = vld [vmem:[%s594] sm:$0xff]
  %v596 = vld [vmem:[%s594 + $0x8] sm:$0xff]
  %v597 = vld [vmem:[%s594 + $0x10] sm:$0xff]
  %v598 = vld [vmem:[%s594 + $0x18] sm:$0xff]
  %599 = vmatprep.subr.mxu0 %v78
  %600 = vmatpush1.msra.mxu0 %v77
  %601 = vmatprep.subr.mxu0 %v74
  %602 = vmatpush1.msra.mxu0 %v73
  %603 = vmatprep.subr.mxu0 %v70
  %604 = vmatpush1.msra.mxu0 %v69
  %605 = vmatprep.subr.mxu0 %v66
  %606 = vmatpush1.msra.mxu0 %v65
  %607 = vmatprep.subr.mxu0 %v62
  %608 = vmatpush1.msra.mxu0 %v61
  %609 = vmatprep.subr.mxu0 %v58
  %610 = vmatpush1.msra.mxu0 %v57
  %611 = vmatprep.subr.mxu0 %v54
  %612 = vmatpush1.msra.mxu0 %v53
  %613 = vmatprep.subr.mxu0 %v50
  %614 = vmatpush1.msra.mxu0 %v49
  %615 = vmatprep.subr.mxu0 %v46
  %616 = vmatpush1.msra.mxu0 %v45
  %617 = vmatprep.subr.mxu0 %v42
  %618 = vmatpush1.msra.mxu0 %v41
  %619 = vmatprep.subr.mxu0 %v38
  %620 = vmatpush1.msra.mxu0 %v37
  %621 = vmatprep.subr.mxu0 %v34
  %622 = vmatpush1.msra.mxu0 %v33
  %623 = vmatprep.subr.mxu0 %v30
  %624 = vmatpush1.msra.mxu0 %v29
  %625 = vmatprep.subr.mxu0 %v26
  %626 = vmatpush1.msra.mxu0 %v25
  %627 = vmatprep.subr.mxu0 %v22
  %628 = vmatpush1.msra.mxu0 %v21
  %629 = vmatprep.subr.mxu0 %v18
  %630 = vmatpush1.msra.mxu0 %v17
  %631 = vmatprep.subr.mxu0 0.0
  %632 = vmatpush2.msra.mxu0 0.0
  %633 = vmatprep.subr.mxu0 0.0
  %634 = vmatpush2.msra.mxu0 0.0
  %635 = vmatprep.subr.mxu0 0.0
  %636 = vmatpush2.msra.mxu0 0.0
  %637 = vmatprep.subr.mxu0 0.0
  %638 = vmatpush2.msra.mxu0 0.0
  %639 = vmatprep.subr.mxu0 0.0
  %640 = vmatpush2.msra.mxu0 0.0
  %641 = vmatprep.subr.mxu0 0.0
  %642 = vmatpush2.msra.mxu0 0.0
  %643 = vmatprep.subr.mxu0 0.0
  %644 = vmatpush2.msra.mxu0 0.0
  %645 = vmatprep.subr.mxu0 0.0
  %646 = vmatpush2.msra.mxu0 0.0
  %647 = vmatprep.subr.mxu0 0.0
  %648 = vmatpush2.msra.mxu0 0.0
  %649 = vmatprep.subr.mxu0 0.0
  %650 = vmatpush2.msra.mxu0 0.0
  %651 = vmatprep.subr.mxu0 0.0
  %652 = vmatpush2.msra.mxu0 0.0
  %653 = vmatprep.subr.mxu0 0.0
  %654 = vmatpush2.msra.mxu0 0.0
  %655 = vmatprep.subr.mxu0 0.0
  %656 = vmatpush2.msra.mxu0 0.0
  %657 = vmatprep.subr.mxu0 0.0
  %658 = vmatpush2.msra.mxu0 0.0
  %659 = vmatprep.subr.mxu0 0.0
  %660 = vmatpush2.msra.mxu0 0.0
  %661 = vmatprep.subr.mxu0 0.0
  %662 = vmatpush2.msra.mxu0 0.0
  %663 = vmatprep.mubr.f32.mxu0 0.0
  %664 = vmatmul.mubr.f32.gmra.mxu0 %v591
  %v665 = vpop.f32.mrf.mxu0
  %v666 = vadd.f32 0.0, %v665
  %v667 = vpop.f32.mrf.mxu0
  %v668 = vadd.f32 0.0, %v667
  %669 = vdwg.mxu0
  %670 = vmatprep.subr.mxu0 %v80
  %671 = vmatpush1.msra.mxu0 %v79
  %672 = vmatprep.subr.mxu0 %v76
  %673 = vmatpush1.msra.mxu0 %v75
  %674 = vmatprep.subr.mxu0 %v72
  %675 = vmatpush1.msra.mxu0 %v71
  %676 = vmatprep.subr.mxu0 %v68
  %677 = vmatpush1.msra.mxu0 %v67
  %678 = vmatprep.subr.mxu0 %v64
  %679 = vmatpush1.msra.mxu0 %v63
  %680 = vmatprep.subr.mxu0 %v60
  %681 = vmatpush1.msra.mxu0 %v59
  %682 = vmatprep.subr.mxu0 %v56
  %683 = vmatpush1.msra.mxu0 %v55
  %684 = vmatprep.subr.mxu0 %v52
  %685 = vmatpush1.msra.mxu0 %v51
  %686 = vmatprep.subr.mxu0 %v48
  %687 = vmatpush1.msra.mxu0 %v47
  %688 = vmatprep.subr.mxu0 %v44
  %689 = vmatpush1.msra.mxu0 %v43
  %690 = vmatprep.subr.mxu0 %v40
  %691 = vmatpush1.msra.mxu0 %v39
  %692 = vmatprep.subr.mxu0 %v36
  %693 = vmatpush1.msra.mxu0 %v35
  %694 = vmatprep.subr.mxu0 %v32
  %695 = vmatpush1.msra.mxu0 %v31
  %696 = vmatprep.subr.mxu0 %v28
  %697 = vmatpush1.msra.mxu0 %v27
  %698 = vmatprep.subr.mxu0 %v24
  %699 = vmatpush1.msra.mxu0 %v23
  %700 = vmatprep.subr.mxu0 %v20
  %701 = vmatpush1.msra.mxu0 %v19
  %702 = vmatprep.subr.mxu0 0.0
  %703 = vmatpush2.msra.mxu0 0.0
  %704 = vmatprep.subr.mxu0 0.0
  %705 = vmatpush2.msra.mxu0 0.0
  %706 = vmatprep.subr.mxu0 0.0
  %707 = vmatpush2.msra.mxu0 0.0
  %708 = vmatprep.subr.mxu0 0.0
  %709 = vmatpush2.msra.mxu0 0.0
  %710 = vmatprep.subr.mxu0 0.0
  %711 = vmatpush2.msra.mxu0 0.0
  %712 = vmatprep.subr.mxu0 0.0
  %713 = vmatpush2.msra.mxu0 0.0
  %714 = vmatprep.subr.mxu0 0.0
  %715 = vmatpush2.msra.mxu0 0.0
  %716 = vmatprep.subr.mxu0 0.0
  %717 = vmatpush2.msra.mxu0 0.0
  %718 = vmatprep.subr.mxu0 0.0
  %719 = vmatpush2.msra.mxu0 0.0
  %720 = vmatprep.subr.mxu0 0.0
  %721 = vmatpush2.msra.mxu0 0.0
  %722 = vmatprep.subr.mxu0 0.0
  %723 = vmatpush2.msra.mxu0 0.0
  %724 = vmatprep.subr.mxu0 0.0
  %725 = vmatpush2.msra.mxu0 0.0
  %726 = vmatprep.subr.mxu0 0.0
  %727 = vmatpush2.msra.mxu0 0.0
  %728 = vmatprep.subr.mxu0 0.0
  %729 = vmatpush2.msra.mxu0 0.0
  %730 = vmatprep.subr.mxu0 0.0
  %731 = vmatpush2.msra.mxu0 0.0
  %732 = vmatprep.subr.mxu0 0.0
  %733 = vmatpush2.msra.mxu0 0.0
  %734 = vmatprep.mubr.f32.mxu0 0.0
  %735 = vmatmul.mubr.f32.gmra.mxu0 %v591
  %v736 = vpop.f32.mrf.mxu0
  %v737 = vadd.f32 0.0, %v736
  %v738 = vpop.f32.mrf.mxu0
  %v739 = vadd.f32 0.0, %v738
  %740 = vdwg.mxu0
  %v741 = vadd.f32 %v595, %v666
  %v742 = vadd.f32 %v596, %v668
  %v743 = vadd.f32 %v597, %v737
  %v744 = vadd.f32 %v598, %v739
  %v745 = vmul.f32 %v741, 0.5
  %v746 = vmul.f32 %v742, 0.5
  %v747 = vmul.f32 %v743, 0.5
  %v748 = vtanh.pop %v745
  %v749 = vtanh.pop %v746
  %v750 = vtanh.pop %v747
  %v751 = vadd.f32 %v748, 1.0
  %v752 = vadd.f32 %v749, 1.0
  %v753 = vadd.f32 %v750, 1.0
  %v754 = vmul.f32 %v751, 0.5
  %v755 = vmul.f32 %v752, 0.5
  %v756 = vmul.f32 %v753, 0.5
  %v757 = vtanh.pop %v744
  %v758 = vmul.f32 %v755, %v589
  %v759 = vmul.f32 %v754, %v757
  %v760 = vadd.f32 %v758, %v759
  %v761 = vtanh.pop %v760
  %v762 = vmul.f32 %v756, %v761
  %s763 = scalar_lea.vmem %s2, 24
  %764 = vst [vmem:[%s763] sm:$0xff] %v762
  %s765 = scalar_lea.vmem %s0, 128
  %v766 = vld [vmem:[%s765] sm:$0xff]
  %v767 = vld [vmem:[%s765 + $0x8] sm:$0xff]
  %v768 = vld [vmem:[%s765 + $0x10] sm:$0xff]
  %v769 = vld [vmem:[%s765 + $0x18] sm:$0xff]
  %770 = vmatprep.subr.mxu0 %v78
  %771 = vmatpush1.msra.mxu0 %v77
  %772 = vmatprep.subr.mxu0 %v74
  %773 = vmatpush1.msra.mxu0 %v73
  %774 = vmatprep.subr.mxu0 %v70
  %775 = vmatpush1.msra.mxu0 %v69
  %776 = vmatprep.subr.mxu0 %v66
  %777 = vmatpush1.msra.mxu0 %v65
  %778 = vmatprep.subr.mxu0 %v62
  %779 = vmatpush1.msra.mxu0 %v61
  %780 = vmatprep.subr.mxu0 %v58
  %781 = vmatpush1.msra.mxu0 %v57
  %782 = vmatprep.subr.mxu0 %v54
  %783 = vmatpush1.msra.mxu0 %v53
  %784 = vmatprep.subr.mxu0 %v50
  %785 = vmatpush1.msra.mxu0 %v49
  %786 = vmatprep.subr.mxu0 %v46
  %787 = vmatpush1.msra.mxu0 %v45
  %788 = vmatprep.subr.mxu0 %v42
  %789 = vmatpush1.msra.mxu0 %v41
  %790 = vmatprep.subr.mxu0 %v38
  %791 = vmatpush1.msra.mxu0 %v37
  %792 = vmatprep.subr.mxu0 %v34
  %793 = vmatpush1.msra.mxu0 %v33
  %794 = vmatprep.subr.mxu0 %v30
  %795 = vmatpush1.msra.mxu0 %v29
  %796 = vmatprep.subr.mxu0 %v26
  %797 = vmatpush1.msra.mxu0 %v25
  %798 = vmatprep.subr.mxu0 %v22
  %799 = vmatpush1.msra.mxu0 %v21
  %800 = vmatprep.subr.mxu0 %v18
  %801 = vmatpush1.msra.mxu0 %v17
  %802 = vmatprep.subr.mxu0 0.0
  %803 = vmatpush2.msra.mxu0 0.0
  %804 = vmatprep.subr.mxu0 0.0
  %805 = vmatpush2.msra.mxu0 0.0
  %806 = vmatprep.subr.mxu0 0.0
  %807 = vmatpush2.msra.mxu0 0.0
  %808 = vmatprep.subr.mxu0 0.0
  %809 = vmatpush2.msra.mxu0 0.0
  %810 = vmatprep.subr.mxu0 0.0
  %811 = vmatpush2.msra.mxu0 0.0
  %812 = vmatprep.subr.mxu0 0.0
  %813 = vmatpush2.msra.mxu0 0.0
  %814 = vmatprep.subr.mxu0 0.0
  %815 = vmatpush2.msra.mxu0 0.0
  %816 = vmatprep.subr.mxu0 0.0
  %817 = vmatpush2.msra.mxu0 0.0
  %818 = vmatprep.subr.mxu0 0.0
  %819 = vmatpush2.msra.mxu0 0.0
  %820 = vmatprep.subr.mxu0 0.0
  %821 = vmatpush2.msra.mxu0 0.0
  %822 = vmatprep.subr.mxu0 0.0
  %823 = vmatpush2.msra.mxu0 0.0
  %824 = vmatprep.subr.mxu0 0.0
  %825 = vmatpush2.msra.mxu0 0.0
  %826 = vmatprep.subr.mxu0 0.0
  %827 = vmatpush2.msra.mxu0 0.0
  %828 = vmatprep.subr.mxu0 0.0
  %829 = vmatpush2.msra.mxu0 0.0
  %830 = vmatprep.subr.mxu0 0.0
  %831 = vmatpush2.msra.mxu0 0.0
  %832 = vmatprep.subr.mxu0 0.0
  %833 = vmatpush2.msra.mxu0 0.0
  %834 = vmatprep.mubr.f32.mxu0 0.0
  %835 = vmatmul.mubr.f32.gmra.mxu0 %v762
  %v836 = vpop.f32.mrf.mxu0
  %v837 = vadd.f32 0.0, %v836
  %v838 = vpop.f32.mrf.mxu0
  %v839 = vadd.f32 0.0, %v838
  %840 = vdwg.mxu0
  %841 = vmatprep.subr.mxu0 %v80
  %842 = vmatpush1.msra.mxu0 %v79
  %843 = vmatprep.subr.mxu0 %v76
  %844 = vmatpush1.msra.mxu0 %v75
  %845 = vmatprep.subr.mxu0 %v72
  %846 = vmatpush1.msra.mxu0 %v71
  %847 = vmatprep.subr.mxu0 %v68
  %848 = vmatpush1.msra.mxu0 %v67
  %849 = vmatprep.subr.mxu0 %v64
  %850 = vmatpush1.msra.mxu0 %v63
  %851 = vmatprep.subr.mxu0 %v60
  %852 = vmatpush1.msra.mxu0 %v59
  %853 = vmatprep.subr.mxu0 %v56
  %854 = vmatpush1.msra.mxu0 %v55
  %855 = vmatprep.subr.mxu0 %v52
  %856 = vmatpush1.msra.mxu0 %v51
  %857 = vmatprep.subr.mxu0 %v48
  %858 = vmatpush1.msra.mxu0 %v47
  %859 = vmatprep.subr.mxu0 %v44
  %860 = vmatpush1.msra.mxu0 %v43
  %861 = vmatprep.subr.mxu0 %v40
  %862 = vmatpush1.msra.mxu0 %v39
  %863 = vmatprep.subr.mxu0 %v36
  %864 = vmatpush1.msra.mxu0 %v35
  %865 = vmatprep.subr.mxu0 %v32
  %866 = vmatpush1.msra.mxu0 %v31
  %867 = vmatprep.subr.mxu0 %v28
  %868 = vmatpush1.msra.mxu0 %v27
  %869 = vmatprep.subr.mxu0 %v24
  %870 = vmatpush1.msra.mxu0 %v23
  %871 = vmatprep.subr.mxu0 %v20
  %872 = vmatpush1.msra.mxu0 %v19
  %873 = vmatprep.subr.mxu0 0.0
  %874 = vmatpush2.msra.mxu0 0.0
  %875 = vmatprep.subr.mxu0 0.0
  %876 = vmatpush2.msra.mxu0 0.0
  %877 = vmatprep.subr.mxu0 0.0
  %878 = vmatpush2.msra.mxu0 0.0
  %879 = vmatprep.subr.mxu0 0.0
  %880 = vmatpush2.msra.mxu0 0.0
  %881 = vmatprep.subr.mxu0 0.0
  %882 = vmatpush2.msra.mxu0 0.0
  %883 = vmatprep.subr.mxu0 0.0
  %884 = vmatpush2.msra.mxu0 0.0
  %885 = vmatprep.subr.mxu0 0.0
  %886 = vmatpush2.msra.mxu0 0.0
  %887 = vmatprep.subr.mxu0 0.0
  %888 = vmatpush2.msra.mxu0 0.0
  %889 = vmatprep.subr.mxu0 0.0
  %890 = vmatpush2.msra.mxu0 0.0
  %891 = vmatprep.subr.mxu0 0.0
  %892 = vmatpush2.msra.mxu0 0.0
  %893 = vmatprep.subr.mxu0 0.0
  %894 = vmatpush2.msra.mxu0 0.0
  %895 = vmatprep.subr.mxu0 0.0
  %896 = vmatpush2.msra.mxu0 0.0
  %897 = vmatprep.subr.mxu0 0.0
  %898 = vmatpush2.msra.mxu0 0.0
  %899 = vmatprep.subr.mxu0 0.0
  %900 = vmatpush2.msra.mxu0 0.0
  %901 = vmatprep.subr.mxu0 0.0
  %902 = vmatpush2.msra.mxu0 0.0
  %903 = vmatprep.subr.mxu0 0.0
  %904 = vmatpush2.msra.mxu0 0.0
  %905 = vmatprep.mubr.f32.mxu0 0.0
  %906 = vmatmul.mubr.f32.gmra.mxu0 %v762
  %v907 = vpop.f32.mrf.mxu0
  %v908 = vadd.f32 0.0, %v907
  %v909 = vpop.f32.mrf.mxu0
  %v910 = vadd.f32 0.0, %v909
  %911 = vdwg.mxu0
  %v912 = vadd.f32 %v766, %v837
  %v913 = vadd.f32 %v767, %v839
  %v914 = vadd.f32 %v768, %v908
  %v915 = vadd.f32 %v769, %v910
  %v916 = vmul.f32 %v912, 0.5
  %v917 = vmul.f32 %v913, 0.5
  %v918 = vmul.f32 %v914, 0.5
  %v919 = vtanh.pop %v916
  %v920 = vtanh.pop %v917
  %v921 = vtanh.pop %v918
  %v922 = vadd.f32 %v919, 1.0
  %v923 = vadd.f32 %v920, 1.0
  %v924 = vadd.f32 %v921, 1.0
  %v925 = vmul.f32 %v922, 0.5
  %v926 = vmul.f32 %v923, 0.5
  %v927 = vmul.f32 %v924, 0.5
  %v928 = vtanh.pop %v915
  %v929 = vmul.f32 %v926, %v760
  %v930 = vmul.f32 %v925, %v928
  %v931 = vadd.f32 %v929, %v930
  %v932 = vtanh.pop %v931
  %v933 = vmul.f32 %v927, %v932
  %s934 = scalar_lea.vmem %s2, 32
  %935 = vst [vmem:[%s934] sm:$0xff] %v933
  %s936 = scalar_lea.vmem %s0, 160
  %v937 = vld [vmem:[%s936] sm:$0xff]
  %v938 = vld [vmem:[%s936 + $0x8] sm:$0xff]
  %v939 = vld [vmem:[%s936 + $0x10] sm:$0xff]
  %v940 = vld [vmem:[%s936 + $0x18] sm:$0xff]
  %941 = vmatprep.subr.mxu0 %v78
  %942 = vmatpush1.msra.mxu0 %v77
  %943 = vmatprep.subr.mxu0 %v74
  %944 = vmatpush1.msra.mxu0 %v73
  %945 = vmatprep.subr.mxu0 %v70
  %946 = vmatpush1.msra.mxu0 %v69
  %947 = vmatprep.subr.mxu0 %v66
  %948 = vmatpush1.msra.mxu0 %v65
  %949 = vmatprep.subr.mxu0 %v62
  %950 = vmatpush1.msra.mxu0 %v61
  %951 = vmatprep.subr.mxu0 %v58
  %952 = vmatpush1.msra.mxu0 %v57
  %953 = vmatprep.subr.mxu0 %v54
  %954 = vmatpush1.msra.mxu0 %v53
  %955 = vmatprep.subr.mxu0 %v50
  %956 = vmatpush1.msra.mxu0 %v49
  %957 = vmatprep.subr.mxu0 %v46
  %958 = vmatpush1.msra.mxu0 %v45
  %959 = vmatprep.subr.mxu0 %v42
  %960 = vmatpush1.msra.mxu0 %v41
  %961 = vmatprep.subr.mxu0 %v38
  %962 = vmatpush1.msra.mxu0 %v37
  %963 = vmatprep.subr.mxu0 %v34
  %964 = vmatpush1.msra.mxu0 %v33
  %965 = vmatprep.subr.mxu0 %v30
  %966 = vmatpush1.msra.mxu0 %v29
  %967 = vmatprep.subr.mxu0 %v26
  %968 = vmatpush1.msra.mxu0 %v25
  %969 = vmatprep.subr.mxu0 %v22
  %970 = vmatpush1.msra.mxu0 %v21
  %971 = vmatprep.subr.mxu0 %v18
  %972 = vmatpush1.msra.mxu0 %v17
  %973 = vmatprep.subr.mxu0 0.0
  %974 = vmatpush2.msra.mxu0 0.0
  %975 = vmatprep.subr.mxu0 0.0
  %976 = vmatpush2.msra.mxu0 0.0
  %977 = vmatprep.subr.mxu0 0.0
  %978 = vmatpush2.msra.mxu0 0.0
  %979 = vmatprep.subr.mxu0 0.0
  %980 = vmatpush2.msra.mxu0 0.0
  %981 = vmatprep.subr.mxu0 0.0
  %982 = vmatpush2.msra.mxu0 0.0
  %983 = vmatprep.subr.mxu0 0.0
  %984 = vmatpush2.msra.mxu0 0.0
  %985 = vmatprep.subr.mxu0 0.0
  %986 = vmatpush2.msra.mxu0 0.0
  %987 = vmatprep.subr.mxu0 0.0
  %988 = vmatpush2.msra.mxu0 0.0
  %989 = vmatprep.subr.mxu0 0.0
  %990 = vmatpush2.msra.mxu0 0.0
  %991 = vmatprep.subr.mxu0 0.0
  %992 = vmatpush2.msra.mxu0 0.0
  %993 = vmatprep.subr.mxu0 0.0
  %994 = vmatpush2.msra.mxu0 0.0
  %995 = vmatprep.subr.mxu0 0.0
  %996 = vmatpush2.msra.mxu0 0.0
  %997 = vmatprep.subr.mxu0 0.0
  %998 = vmatpush2.msra.mxu0 0.0
  %999 = vmatprep.subr.mxu0 0.0
  %1000 = vmatpush2.msra.mxu0 0.0
  %1001 = vmatprep.subr.mxu0 0.0
  %1002 = vmatpush2.msra.mxu0 0.0
  %1003 = vmatprep.subr.mxu0 0.0
  %1004 = vmatpush2.msra.mxu0 0.0
  %1005 = vmatprep.mubr.f32.mxu0 0.0
  %1006 = vmatmul.mubr.f32.gmra.mxu0 %v933
  %v1007 = vpop.f32.mrf.mxu0
  %v1008 = vadd.f32 0.0, %v1007
  %v1009 = vpop.f32.mrf.mxu0
  %v1010 = vadd.f32 0.0, %v1009
  %1011 = vdwg.mxu0
  %1012 = vmatprep.subr.mxu0 %v80
  %1013 = vmatpush1.msra.mxu0 %v79
  %1014 = vmatprep.subr.mxu0 %v76
  %1015 = vmatpush1.msra.mxu0 %v75
  %1016 = vmatprep.subr.mxu0 %v72
  %1017 = vmatpush1.msra.mxu0 %v71
  %1018 = vmatprep.subr.mxu0 %v68
  %1019 = vmatpush1.msra.mxu0 %v67
  %1020 = vmatprep.subr.mxu0 %v64
  %1021 = vmatpush1.msra.mxu0 %v63
  %1022 = vmatprep.subr.mxu0 %v60
  %1023 = vmatpush1.msra.mxu0 %v59
  %1024 = vmatprep.subr.mxu0 %v56
  %1025 = vmatpush1.msra.mxu0 %v55
  %1026 = vmatprep.subr.mxu0 %v52
  %1027 = vmatpush1.msra.mxu0 %v51
  %1028 = vmatprep.subr.mxu0 %v48
  %1029 = vmatpush1.msra.mxu0 %v47
  %1030 = vmatprep.subr.mxu0 %v44
  %1031 = vmatpush1.msra.mxu0 %v43
  %1032 = vmatprep.subr.mxu0 %v40
  %1033 = vmatpush1.msra.mxu0 %v39
  %1034 = vmatprep.subr.mxu0 %v36
  %1035 = vmatpush1.msra.mxu0 %v35
  %1036 = vmatprep.subr.mxu0 %v32
  %1037 = vmatpush1.msra.mxu0 %v31
  %1038 = vmatprep.subr.mxu0 %v28
  %1039 = vmatpush1.msra.mxu0 %v27
  %1040 = vmatprep.subr.mxu0 %v24
  %1041 = vmatpush1.msra.mxu0 %v23
  %1042 = vmatprep.subr.mxu0 %v20
  %1043 = vmatpush1.msra.mxu0 %v19
  %1044 = vmatprep.subr.mxu0 0.0
  %1045 = vmatpush2.msra.mxu0 0.0
  %1046 = vmatprep.subr.mxu0 0.0
  %1047 = vmatpush2.msra.mxu0 0.0
  %1048 = vmatprep.subr.mxu0 0.0
  %1049 = vmatpush2.msra.mxu0 0.0
  %1050 = vmatprep.subr.mxu0 0.0
  %1051 = vmatpush2.msra.mxu0 0.0
  %1052 = vmatprep.subr.mxu0 0.0
  %1053 = vmatpush2.msra.mxu0 0.0
  %1054 = vmatprep.subr.mxu0 0.0
  %1055 = vmatpush2.msra.mxu0 0.0
  %1056 = vmatprep.subr.mxu0 0.0
  %1057 = vmatpush2.msra.mxu0 0.0
  %1058 = vmatprep.subr.mxu0 0.0
  %1059 = vmatpush2.msra.mxu0 0.0
  %1060 = vmatprep.subr.mxu0 0.0
  %1061 = vmatpush2.msra.mxu0 0.0
  %1062 = vmatprep.subr.mxu0 0.0
  %1063 = vmatpush2.msra.mxu0 0.0
  %1064 = vmatprep.subr.mxu0 0.0
  %1065 = vmatpush2.msra.mxu0 0.0
  %1066 = vmatprep.subr.mxu0 0.0
  %1067 = vmatpush2.msra.mxu0 0.0
  %1068 = vmatprep.subr.mxu0 0.0
  %1069 = vmatpush2.msra.mxu0 0.0
  %1070 = vmatprep.subr.mxu0 0.0
  %1071 = vmatpush2.msra.mxu0 0.0
  %1072 = vmatprep.subr.mxu0 0.0
  %1073 = vmatpush2.msra.mxu0 0.0
  %1074 = vmatprep.subr.mxu0 0.0
  %1075 = vmatpush2.msra.mxu0 0.0
  %1076 = vmatprep.mubr.f32.mxu0 0.0
  %1077 = vmatmul.mubr.f32.gmra.mxu0 %v933
  %v1078 = vpop.f32.mrf.mxu0
  %v1079 = vadd.f32 0.0, %v1078
  %v1080 = vpop.f32.mrf.mxu0
  %v1081 = vadd.f32 0.0, %v1080
  %1082 = vdwg.mxu0
  %v1083 = vadd.f32 %v937, %v1008
  %v1084 = vadd.f32 %v938, %v1010
  %v1085 = vadd.f32 %v939, %v1079
  %v1086 = vadd.f32 %v940, %v1081
  %v1087 = vmul.f32 %v1083, 0.5
  %v1088 = vmul.f32 %v1084, 0.5
  %v1089 = vmul.f32 %v1085, 0.5
  %v1090 = vtanh.pop %v1087
  %v1091 = vtanh.pop %v1088
  %v1092 = vtanh.pop %v1089
  %v1093 = vadd.f32 %v1090, 1.0
  %v1094 = vadd.f32 %v1091, 1.0
  %v1095 = vadd.f32 %v1092, 1.0
  %v1096 = vmul.f32 %v1093, 0.5
  %v1097 = vmul.f32 %v1094, 0.5
  %v1098 = vmul.f32 %v1095, 0.5
  %v1099 = vtanh.pop %v1086
  %v1100 = vmul.f32 %v1097, %v931
  %v1101 = vmul.f32 %v1096, %v1099
  %v1102 = vadd.f32 %v1100, %v1101
  %v1103 = vtanh.pop %v1102
  %v1104 = vmul.f32 %v1098, %v1103
  %s1105 = scalar_lea.vmem %s2, 40
  %1106 = vst [vmem:[%s1105] sm:$0xff] %v1104
  %s1107 = scalar_lea.vmem %s0, 192
  %v1108 = vld [vmem:[%s1107] sm:$0xff]
  %v1109 = vld [vmem:[%s1107 + $0x8] sm:$0xff]
  %v1110 = vld [vmem:[%s1107 + $0x10] sm:$0xff]
  %v1111 = vld [vmem:[%s1107 + $0x18] sm:$0xff]
  %1112 = vmatprep.subr.mxu0 %v78
  %1113 = vmatpush1.msra.mxu0 %v77
  %1114 = vmatprep.subr.mxu0 %v74
  %1115 = vmatpush1.msra.mxu0 %v73
  %1116 = vmatprep.subr.mxu0 %v70
  %1117 = vmatpush1.msra.mxu0 %v69
  %1118 = vmatprep.subr.mxu0 %v66
  %1119 = vmatpush1.msra.mxu0 %v65
  %1120 = vmatprep.subr.mxu0 %v62
  %1121 = vmatpush1.msra.mxu0 %v61
  %1122 = vmatprep.subr.mxu0 %v58
  %1123 = vmatpush1.msra.mxu0 %v57
  %1124 = vmatprep.subr.mxu0 %v54
  %1125 = vmatpush1.msra.mxu0 %v53
  %1126 = vmatprep.subr.mxu0 %v50
  %1127 = vmatpush1.msra.mxu0 %v49
  %1128 = vmatprep.subr.mxu0 %v46
  %1129 = vmatpush1.msra.mxu0 %v45
  %1130 = vmatprep.subr.mxu0 %v42
  %1131 = vmatpush1.msra.mxu0 %v41
  %1132 = vmatprep.subr.mxu0 %v38
  %1133 = vmatpush1.msra.mxu0 %v37
  %1134 = vmatprep.subr.mxu0 %v34
  %1135 = vmatpush1.msra.mxu0 %v33
  %1136 = vmatprep.subr.mxu0 %v30
  %1137 = vmatpush1.msra.mxu0 %v29
  %1138 = vmatprep.subr.mxu0 %v26
  %1139 = vmatpush1.msra.mxu0 %v25
  %1140 = vmatprep.subr.mxu0 %v22
  %1141 = vmatpush1.msra.mxu0 %v21
  %1142 = vmatprep.subr.mxu0 %v18
  %1143 = vmatpush1.msra.mxu0 %v17
  %1144 = vmatprep.subr.mxu0 0.0
  %1145 = vmatpush2.msra.mxu0 0.0
  %1146 = vmatprep.subr.mxu0 0.0
  %1147 = vmatpush2.msra.mxu0 0.0
  %1148 = vmatprep.subr.mxu0 0.0
  %1149 = vmatpush2.msra.mxu0 0.0
  %1150 = vmatprep.subr.mxu0 0.0
  %1151 = vmatpush2.msra.mxu0 0.0
  %1152 = vmatprep.subr.mxu0 0.0
  %1153 = vmatpush2.msra.mxu0 0.0
  %1154 = vmatprep.subr.mxu0 0.0
  %1155 = vmatpush2.msra.mxu0 0.0
  %1156 = vmatprep.subr.mxu0 0.0
  %1157 = vmatpush2.msra.mxu0 0.0
  %1158 = vmatprep.subr.mxu0 0.0
  %1159 = vmatpush2.msra.mxu0 0.0
  %1160 = vmatprep.subr.mxu0 0.0
  %1161 = vmatpush2.msra.mxu0 0.0
  %1162 = vmatprep.subr.mxu0 0.0
  %1163 = vmatpush2.msra.mxu0 0.0
  %1164 = vmatprep.subr.mxu0 0.0
  %1165 = vmatpush2.msra.mxu0 0.0
  %1166 = vmatprep.subr.mxu0 0.0
  %1167 = vmatpush2.msra.mxu0 0.0
  %1168 = vmatprep.subr.mxu0 0.0
  %1169 = vmatpush2.msra.mxu0 0.0
  %1170 = vmatprep.subr.mxu0 0.0
  %1171 = vmatpush2.msra.mxu0 0.0
  %1172 = vmatprep.subr.mxu0 0.0
  %1173 = vmatpush2.msra.mxu0 0.0
  %1174 = vmatprep.subr.mxu0 0.0
  %1175 = vmatpush2.msra.mxu0 0.0
  %1176 = vmatprep.mubr.f32.mxu0 0.0
  %1177 = vmatmul.mubr.f32.gmra.mxu0 %v1104
  %v1178 = vpop.f32.mrf.mxu0
  %v1179 = vadd.f32 0.0, %v1178
  %v1180 = vpop.f32.mrf.mxu0
  %v1181 = vadd.f32 0.0, %v1180
  %1182 = vdwg.mxu0
  %1183 = vmatprep.subr.mxu0 %v80
  %1184 = vmatpush1.msra.mxu0 %v79
  %1185 = vmatprep.subr.mxu0 %v76
  %1186 = vmatpush1.msra.mxu0 %v75
  %1187 = vmatprep.subr.mxu0 %v72
  %1188 = vmatpush1.msra.mxu0 %v71
  %1189 = vmatprep.subr.mxu0 %v68
  %1190 = vmatpush1.msra.mxu0 %v67
  %1191 = vmatprep.subr.mxu0 %v64
  %1192 = vmatpush1.msra.mxu0 %v63
  %1193 = vmatprep.subr.mxu0 %v60
  %1194 = vmatpush1.msra.mxu0 %v59
  %1195 = vmatprep.subr.mxu0 %v56
  %1196 = vmatpush1.msra.mxu0 %v55
  %1197 = vmatprep.subr.mxu0 %v52
  %1198 = vmatpush1.msra.mxu0 %v51
  %1199 = vmatprep.subr.mxu0 %v48
  %1200 = vmatpush1.msra.mxu0 %v47
  %1201 = vmatprep.subr.mxu0 %v44
  %1202 = vmatpush1.msra.mxu0 %v43
  %1203 = vmatprep.subr.mxu0 %v40
  %1204 = vmatpush1.msra.mxu0 %v39
  %1205 = vmatprep.subr.mxu0 %v36
  %1206 = vmatpush1.msra.mxu0 %v35
  %1207 = vmatprep.subr.mxu0 %v32
  %1208 = vmatpush1.msra.mxu0 %v31
  %1209 = vmatprep.subr.mxu0 %v28
  %1210 = vmatpush1.msra.mxu0 %v27
  %1211 = vmatprep.subr.mxu0 %v24
  %1212 = vmatpush1.msra.mxu0 %v23
  %1213 = vmatprep.subr.mxu0 %v20
  %1214 = vmatpush1.msra.mxu0 %v19
  %1215 = vmatprep.subr.mxu0 0.0
  %1216 = vmatpush2.msra.mxu0 0.0
  %1217 = vmatprep.subr.mxu0 0.0
  %1218 = vmatpush2.msra.mxu0 0.0
  %1219 = vmatprep.subr.mxu0 0.0
  %1220 = vmatpush2.msra.mxu0 0.0
  %1221 = vmatprep.subr.mxu0 0.0
  %1222 = vmatpush2.msra.mxu0 0.0
  %1223 = vmatprep.subr.mxu0 0.0
  %1224 = vmatpush2.msra.mxu0 0.0
  %1225 = vmatprep.subr.mxu0 0.0
  %1226 = vmatpush2.msra.mxu0 0.0
  %1227 = vmatprep.subr.mxu0 0.0
  %1228 = vmatpush2.msra.mxu0 0.0
  %1229 = vmatprep.subr.mxu0 0.0
  %1230 = vmatpush2.msra.mxu0 0.0
  %1231 = vmatprep.subr.mxu0 0.0
  %1232 = vmatpush2.msra.mxu0 0.0
  %1233 = vmatprep.subr.mxu0 0.0
  %1234 = vmatpush2.msra.mxu0 0.0
  %1235 = vmatprep.subr.mxu0 0.0
  %1236 = vmatpush2.msra.mxu0 0.0
  %1237 = vmatprep.subr.mxu0 0.0
  %1238 = vmatpush2.msra.mxu0 0.0
  %1239 = vmatprep.subr.mxu0 0.0
  %1240 = vmatpush2.msra.mxu0 0.0
  %1241 = vmatprep.subr.mxu0 0.0
  %1242 = vmatpush2.msra.mxu0 0.0
  %1243 = vmatprep.subr.mxu0 0.0
  %1244 = vmatpush2.msra.mxu0 0.0
  %1245 = vmatprep.subr.mxu0 0.0
  %1246 = vmatpush2.msra.mxu0 0.0
  %1247 = vmatprep.mubr.f32.mxu0 0.0
  %1248 = vmatmul.mubr.f32.gmra.mxu0 %v1104
  %v1249 = vpop.f32.mrf.mxu0
  %v1250 = vadd.f32 0.0, %v1249
  %v1251 = vpop.f32.mrf.mxu0
  %v1252 = vadd.f32 0.0, %v1251
  %1253 = vdwg.mxu0
  %v1254 = vadd.f32 %v1108, %v1179
  %v1255 = vadd.f32 %v1109, %v1181
  %v1256 = vadd.f32 %v1110, %v1250
  %v1257 = vadd.f32 %v1111, %v1252
  %v1258 = vmul.f32 %v1254, 0.5
  %v1259 = vmul.f32 %v1255, 0.5
  %v1260 = vmul.f32 %v1256, 0.5
  %v1261 = vtanh.pop %v1258
  %v1262 = vtanh.pop %v1259
  %v1263 = vtanh.pop %v1260
  %v1264 = vadd.f32 %v1261, 1.0
  %v1265 = vadd.f32 %v1262, 1.0
  %v1266 = vadd.f32 %v1263, 1.0
  %v1267 = vmul.f32 %v1264, 0.5
  %v1268 = vmul.f32 %v1265, 0.5
  %v1269 = vmul.f32 %v1266, 0.5
  %v1270 = vtanh.pop %v1257
  %v1271 = vmul.f32 %v1268, %v1102
  %v1272 = vmul.f32 %v1267, %v1270
  %v1273 = vadd.f32 %v1271, %v1272
  %v1274 = vtanh.pop %v1273
  %v1275 = vmul.f32 %v1269, %v1274
  %s1276 = scalar_lea.vmem %s2, 48
  %1277 = vst [vmem:[%s1276] sm:$0xff] %v1275
  %s1278 = scalar_lea.vmem %s0, 224
  %v1279 = vld [vmem:[%s1278] sm:$0xff]
  %v1280 = vld [vmem:[%s1278 + $0x8] sm:$0xff]
  %v1281 = vld [vmem:[%s1278 + $0x10] sm:$0xff]
  %v1282 = vld [vmem:[%s1278 + $0x18] sm:$0xff]
  %1283 = vmatprep.subr.mxu0 %v78
  %1284 = vmatpush1.msra.mxu0 %v77
  %1285 = vmatprep.subr.mxu0 %v74
  %1286 = vmatpush1.msra.mxu0 %v73
  %1287 = vmatprep.subr.mxu0 %v70
  %1288 = vmatpush1.msra.mxu0 %v69
  %1289 = vmatprep.subr.mxu0 %v66
  %1290 = vmatpush1.msra.mxu0 %v65
  %1291 = vmatprep.subr.mxu0 %v62
  %1292 = vmatpush1.msra.mxu0 %v61
  %1293 = vmatprep.subr.mxu0 %v58
  %1294 = vmatpush1.msra.mxu0 %v57
  %1295 = vmatprep.subr.mxu0 %v54
  %1296 = vmatpush1.msra.mxu0 %v53
  %1297 = vmatprep.subr.mxu0 %v50
  %1298 = vmatpush1.msra.mxu0 %v49
  %1299 = vmatprep.subr.mxu0 %v46
  %1300 = vmatpush1.msra.mxu0 %v45
  %1301 = vmatprep.subr.mxu0 %v42
  %1302 = vmatpush1.msra.mxu0 %v41
  %1303 = vmatprep.subr.mxu0 %v38
  %1304 = vmatpush1.msra.mxu0 %v37
  %1305 = vmatprep.subr.mxu0 %v34
  %1306 = vmatpush1.msra.mxu0 %v33
  %1307 = vmatprep.subr.mxu0 %v30
  %1308 = vmatpush1.msra.mxu0 %v29
  %1309 = vmatprep.subr.mxu0 %v26
  %1310 = vmatpush1.msra.mxu0 %v25
  %1311 = vmatprep.subr.mxu0 %v22
  %1312 = vmatpush1.msra.mxu0 %v21
  %1313 = vmatprep.subr.mxu0 %v18
  %1314 = vmatpush1.msra.mxu0 %v17
  %1315 = vmatprep.subr.mxu0 0.0
  %1316 = vmatpush2.msra.mxu0 0.0
  %1317 = vmatprep.subr.mxu0 0.0
  %1318 = vmatpush2.msra.mxu0 0.0
  %1319 = vmatprep.subr.mxu0 0.0
  %1320 = vmatpush2.msra.mxu0 0.0
  %1321 = vmatprep.subr.mxu0 0.0
  %1322 = vmatpush2.msra.mxu0 0.0
  %1323 = vmatprep.subr.mxu0 0.0
  %1324 = vmatpush2.msra.mxu0 0.0
  %1325 = vmatprep.subr.mxu0 0.0
  %1326 = vmatpush2.msra.mxu0 0.0
  %1327 = vmatprep.subr.mxu0 0.0
  %1328 = vmatpush2.msra.mxu0 0.0
  %1329 = vmatprep.subr.mxu0 0.0
  %1330 = vmatpush2.msra.mxu0 0.0
  %1331 = vmatprep.subr.mxu0 0.0
  %1332 = vmatpush2.msra.mxu0 0.0
  %1333 = vmatprep.subr.mxu0 0.0
  %1334 = vmatpush2.msra.mxu0 0.0
  %1335 = vmatprep.subr.mxu0 0.0
  %1336 = vmatpush2.msra.mxu0 0.0
  %1337 = vmatprep.subr.mxu0 0.0
  %1338 = vmatpush2.msra.mxu0 0.0
  %1339 = vmatprep.subr.mxu0 0.0
  %1340 = vmatpush2.msra.mxu0 0.0
  %1341 = vmatprep.subr.mxu0 0.0
  %1342 = vmatpush2.msra.mxu0 0.0
  %1343 = vmatprep.subr.mxu0 0.0
  %1344 = vmatpush2.msra.mxu0 0.0
  %1345 = vmatprep.subr.mxu0 0.0
  %1346 = vmatpush2.msra.mxu0 0.0
  %1347 = vmatprep.mubr.f32.mxu0 0.0
  %1348 = vmatmul.mubr.f32.gmra.mxu0 %v1275
  %v1349 = vpop.f32.mrf.mxu0
  %v1350 = vadd.f32 0.0, %v1349
  %v1351 = vpop.f32.mrf.mxu0
  %v1352 = vadd.f32 0.0, %v1351
  %1353 = vdwg.mxu0
  %1354 = vmatprep.subr.mxu0 %v80
  %1355 = vmatpush1.msra.mxu0 %v79
  %1356 = vmatprep.subr.mxu0 %v76
  %1357 = vmatpush1.msra.mxu0 %v75
  %1358 = vmatprep.subr.mxu0 %v72
  %1359 = vmatpush1.msra.mxu0 %v71
  %1360 = vmatprep.subr.mxu0 %v68
  %1361 = vmatpush1.msra.mxu0 %v67
  %1362 = vmatprep.subr.mxu0 %v64
  %1363 = vmatpush1.msra.mxu0 %v63
  %1364 = vmatprep.subr.mxu0 %v60
  %1365 = vmatpush1.msra.mxu0 %v59
  %1366 = vmatprep.subr.mxu0 %v56
  %1367 = vmatpush1.msra.mxu0 %v55
  %1368 = vmatprep.subr.mxu0 %v52
  %1369 = vmatpush1.msra.mxu0 %v51
  %1370 = vmatprep.subr.mxu0 %v48
  %1371 = vmatpush1.msra.mxu0 %v47
  %1372 = vmatprep.subr.mxu0 %v44
  %1373 = vmatpush1.msra.mxu0 %v43
  %1374 = vmatprep.subr.mxu0 %v40
  %1375 = vmatpush1.msra.mxu0 %v39
  %1376 = vmatprep.subr.mxu0 %v36
  %1377 = vmatpush1.msra.mxu0 %v35
  %1378 = vmatprep.subr.mxu0 %v32
  %1379 = vmatpush1.msra.mxu0 %v31
  %1380 = vmatprep.subr.mxu0 %v28
  %1381 = vmatpush1.msra.mxu0 %v27
  %1382 = vmatprep.subr.mxu0 %v24
  %1383 = vmatpush1.msra.mxu0 %v23
  %1384 = vmatprep.subr.mxu0 %v20
  %1385 = vmatpush1.msra.mxu0 %v19
  %1386 = vmatprep.subr.mxu0 0.0
  %1387 = vmatpush2.msra.mxu0 0.0
  %1388 = vmatprep.subr.mxu0 0.0
  %1389 = vmatpush2.msra.mxu0 0.0
  %1390 = vmatprep.subr.mxu0 0.0
  %1391 = vmatpush2.msra.mxu0 0.0
  %1392 = vmatprep.subr.mxu0 0.0
  %1393 = vmatpush2.msra.mxu0 0.0
  %1394 = vmatprep.subr.mxu0 0.0
  %1395 = vmatpush2.msra.mxu0 0.0
  %1396 = vmatprep.subr.mxu0 0.0
  %1397 = vmatpush2.msra.mxu0 0.0
  %1398 = vmatprep.subr.mxu0 0.0
  %1399 = vmatpush2.msra.mxu0 0.0
  %1400 = vmatprep.subr.mxu0 0.0
  %1401 = vmatpush2.msra.mxu0 0.0
  %1402 = vmatprep.subr.mxu0 0.0
  %1403 = vmatpush2.msra.mxu0 0.0
  %1404 = vmatprep.subr.mxu0 0.0
  %1405 = vmatpush2.msra.mxu0 0.0
  %1406 = vmatprep.subr.mxu0 0.0
  %1407 = vmatpush2.msra.mxu0 0.0
  %1408 = vmatprep.subr.mxu0 0.0
  %1409 = vmatpush2.msra.mxu0 0.0
  %1410 = vmatprep.subr.mxu0 0.0
  %1411 = vmatpush2.msra.mxu0 0.0
  %1412 = vmatprep.subr.mxu0 0.0
  %1413 = vmatpush2.msra.mxu0 0.0
  %1414 = vmatprep.subr.mxu0 0.0
  %1415 = vmatpush2.msra.mxu0 0.0
  %1416 = vmatprep.subr.mxu0 0.0
  %1417 = vmatpush2.msra.mxu0 0.0
  %1418 = vmatprep.mubr.f32.mxu0 0.0
  %1419 = vmatmul.mubr.f32.gmra.mxu0 %v1275
  %v1420 = vpop.f32.mrf.mxu0
  %v1421 = vadd.f32 0.0, %v1420
  %v1422 = vpop.f32.mrf.mxu0
  %v1423 = vadd.f32 0.0, %v1422
  %1424 = vdwg.mxu0
  %v1425 = vadd.f32 %v1279, %v1350
  %v1426 = vadd.f32 %v1280, %v1352
  %v1427 = vadd.f32 %v1281, %v1421
  %v1428 = vadd.f32 %v1282, %v1423
  %v1429 = vmul.f32 %v1425, 0.5
  %v1430 = vmul.f32 %v1426, 0.5
  %v1431 = vmul.f32 %v1427, 0.5
  %v1432 = vtanh.pop %v1429
  %v1433 = vtanh.pop %v1430
  %v1434 = vtanh.pop %v1431
  %v1435 = vadd.f32 %v1432, 1.0
  %v1436 = vadd.f32 %v1433, 1.0
  %v1437 = vadd.f32 %v1434, 1.0
  %v1438 = vmul.f32 %v1435, 0.5
  %v1439 = vmul.f32 %v1436, 0.5
  %v1440 = vmul.f32 %v1437, 0.5
  %v1441 = vtanh.pop %v1428
  %v1442 = vmul.f32 %v1439, %v1273
  %v1443 = vmul.f32 %v1438, %v1441
  %v1444 = vadd.f32 %v1442, %v1443
  %v1445 = vtanh.pop %v1444
  %v1446 = vmul.f32 %v1440, %v1445
  %s1447 = scalar_lea.vmem %s2, 56
  %1448 = vst [vmem:[%s1447] sm:$0xff] %v1446
  %1449 = vst [vmem:[#allocation2] sm:$0xff] %v1446
  %1450 = vst [vmem:[#allocation3] sm:$0xff] %v1444
  // Predicated region
  $region14: #{batch_rnn_forward.5} parent=0 // pred_check
    _
  $region15: #{batch_rnn_forward.5} parent=0 // pred_check_branch
    %1452 = sbr.rel (0) target = $region17
  $region16: #{batch_rnn_forward.5} parent=0 // pred_region
    _
  $region17: #{batch_rnn_forward.5} parent=0 // pred_fallthru
    _
  // Predicated region
  $region18: #{batch_rnn_forward.5} parent=0 // pred_check
    _
  $region19: #{batch_rnn_forward.5} parent=0 // pred_check_branch
    %1454 = sbr.rel (0) target = $region21
  $region20: #{batch_rnn_forward.5} parent=0 // pred_region
    _
  $region21: #{batch_rnn_forward.5} parent=0 // pred_fallthru
    _

</llo_original>
